<compile_context>
chip_gen: v6e
topology: v6e:2x2x1
jax: 0.10.0
libtpu: 0.0.40
codegen_flags: <defaults>
</compile_context>

<pallas_src>
import functools

import jax
import jax.numpy as jnp
from jax import lax
from jax.experimental import pallas as pl
from jax.experimental.pallas import tpu as pltpu

EMBED = 256          # MultiHeadAttention embed_dim
FFN = EMBED * 4      # ffn hidden dim
STEM_C = 32          # synthetic backbone stem channels
NUM_CLASSES = 10


def _round_up(x, m):
    return ((x + m - 1) // m) * m


def _full_spec(shape):
    # Whole-array block (grid = ()), resident in VMEM.
    return pl.BlockSpec(shape, lambda *_: (0,) * len(shape))


# ---------------------------------------------------------------------------
# Kernel 1: conv stem (im2col matmul + bias + ReLU) with FUSED global avg pool
#   grid = (B, num_spatial_chunks); per-batch channel sums accumulate in VMEM
#   scratch; output is [B, 1, STEM_C] pooled features (no [M, 32] intermediate).
# ---------------------------------------------------------------------------
def stem_gap_kernel(p_ref, w_ref, b_ref, o_ref, acc_ref, *, S, TS):
    j = pl.program_id(1)

    @pl.when(j == 0)
    def _init():
        acc_ref[...] = jnp.zeros_like(acc_ref)

    patches = p_ref[0]                                    # [TS, K] bf16
    y = jnp.dot(patches, w_ref[...], preferred_element_type=jnp.float32)
    y = jnp.maximum(y + b_ref[...], 0.0)                  # [TS, STEM_C] f32

    # Mask spatial rows that are pure padding (S not a multiple of TS).
    row = j * TS + lax.broadcasted_iota(jnp.int32, (TS, 1), 0)
    y = jnp.where(row < S, y, 0.0)

    acc_ref[...] = acc_ref[...] + jnp.sum(y, axis=0, keepdims=True)

    @pl.when(j == pl.num_programs(1) - 1)
    def _finalize():
        o_ref[...] = (acc_ref[...] * (1.0 / S)).reshape(o_ref.shape)


# ---------------------------------------------------------------------------
# Kernel 2: fused head
#   projection to 256 -> MHA(seq_len=1, exact fused V*O) -> residual+LayerNorm
#   -> FFN -> classifier.  Tiny and latency-bound; whole-array VMEM residency.
# ---------------------------------------------------------------------------
def head_kernel(pooled_ref, proj_w_ref, proj_b_ref,
                vo_w_ref, vo_b_ref,
                ln_w_ref, ln_b_ref,
                f1_w_ref, f1_b_ref, f2_w_ref, f2_b_ref,
                c_w_ref, c_b_ref, out_ref):
    # Backbone feature projection -> "features" [B, EMBED]
    x = (jnp.dot(pooled_ref[...], proj_w_ref[...],
                 preferred_element_type=jnp.float32) + proj_b_ref[...])

    # Multi-head self-attention with sequence length 1: softmax over a single
    # key is identically 1, so attn_out == out_proj(V).  V and out_proj are
    # pre-fused in the wrapper into (vo_w, vo_b) -- exact.
    attn = (jnp.dot(x, vo_w_ref[...],
                    preferred_element_type=jnp.float32) + vo_b_ref[...])

    # Residual + LayerNorm (eps = 1e-5, PyTorch default)
    h = x + attn
    mu = jnp.mean(h, axis=-1, keepdims=True)
    var = jnp.mean((h - mu) ** 2, axis=-1, keepdims=True)
    hn = (h - mu) * lax.rsqrt(var + 1e-5) * ln_w_ref[...] + ln_b_ref[...]

    # FFN: Linear(E, 4E) -> ReLU -> Linear(4E, E)
    f1 = jnp.maximum(
        jnp.dot(hn, f1_w_ref[...], preferred_element_type=jnp.float32)
        + f1_b_ref[...], 0.0)
    f2 = (jnp.dot(f1, f2_w_ref[...], preferred_element_type=jnp.float32)
          + f2_b_ref[...])

    # Classifier Linear(256, num_classes) on the ffn output (no second residual,
    # exactly as in the PyTorch forward).
    out_ref[...] = (jnp.dot(f2, c_w_ref[...],
                            preferred_element_type=jnp.float32) + c_b_ref[...])


# ---------------------------------------------------------------------------
# Glue: im2col for the stride-2, pad-1, 3x3 stem conv (PyTorch output size).
# ---------------------------------------------------------------------------
def im2col_stride2(x):
    # x: [B, C, H, W] -> patches [B, Ho*Wo, C*9], feature order (c, kh*3+kw)
    B, C, H, W = x.shape
    Ho = (H - 1) // 2 + 1          # floor((H + 2*1 - 3)/2) + 1
    Wo = (W - 1) // 2 + 1
    xp = jnp.pad(x, ((0, 0), (0, 0), (1, 1), (1, 1)))
    cols = []
    for kh in range(3):
        for kw in range(3):
            cols.append(xp[:, :, kh:kh + 2 * Ho - 1:2, kw:kw + 2 * Wo - 1:2])
    patches = jnp.stack(cols, axis=-1)             # [B, C, Ho, Wo, 9]
    patches = patches.transpose(0, 2, 3, 1, 4)     # [B, Ho, Wo, C, 9]
    return patches.reshape(B, Ho * Wo, C * 9), Ho, Wo


# ---------------------------------------------------------------------------
# Parameter init (deterministic, synthetic)
# ---------------------------------------------------------------------------
def init_params(key, num_classes=NUM_CLASSES):
    ks = jax.random.split(key, 10)

    def w(k, shape, scale):
        return jax.random.normal(k, shape, jnp.float32) * scale

    p = {}
    # stem conv weight, stored pre-flattened in im2col layout [C*9, STEM_C]
    p["stem_w"] = w(ks[0], (3 * 9, STEM_C), 0.1)
    p["stem_b"] = jnp.zeros((1, STEM_C), jnp.float32)
    # projection to embed dim (stand-in for the trunk's deep feature extractor)
    p["proj_w"] = w(ks[1], (STEM_C, EMBED), 0.1)
    p["proj_b"] = jnp.zeros((1, EMBED), jnp.float32)
    # MultiheadAttention: value projection (slice of in_proj) + out_proj (x @ W)
    p["v_w"] = w(ks[2], (EMBED, EMBED), 0.05)
    p["v_b"] = jnp.zeros((1, EMBED), jnp.float32)
    p["o_w"] = w(ks[3], (EMBED, EMBED), 0.05)
    p["o_b"] = jnp.zeros((1, EMBED), jnp.float32)
    # LayerNorm(embed_dim): PyTorch default init (ones / zeros)
    p["ln_w"] = jnp.ones((1, EMBED), jnp.float32)
    p["ln_b"] = jnp.zeros((1, EMBED), jnp.float32)
    # FFN
    p["f1_w"] = w(ks[4], (EMBED, FFN), 0.05)
    p["f1_b"] = jnp.zeros((1, FFN), jnp.float32)
    p["f2_w"] = w(ks[5], (FFN, EMBED), 0.05)
    p["f2_b"] = jnp.zeros((1, EMBED), jnp.float32)
    # classifier
    p["c_w"] = w(ks[6], (EMBED, num_classes), 0.05)
    p["c_b"] = jnp.zeros((1, num_classes), jnp.float32)
    return p


# ---------------------------------------------------------------------------
# Forward
# ---------------------------------------------------------------------------
@jax.jit
def regnet_with_attention_forward(x, params):
    B = x.shape[0]
    patches, Ho, Wo = im2col_stride2(x)          # [B, S, K] f32
    S = Ho * Wo
    K = patches.shape[-1]

    # Spatial chunk size: big enough for HBM-roofline pipelining, capped so
    # double-buffered bf16 tiles stay well under v5e's 16 MiB scoped VMEM.
    TS = min(512, _round_up(S, 8))
    n_chunks = pl.cdiv(S, TS)
    S_pad = n_chunks * TS
    if S_pad != S:
        patches = jnp.pad(patches, ((0, 0), (0, S_pad - S), (0, 0)))

    # bf16 inputs halve HBM traffic for the memory-bound stem; f32 accumulation.
    patches_bf16 = patches.astype(jnp.bfloat16)
    stem_w = params["stem_w"].astype(jnp.bfloat16)
    stem_b = params["stem_b"]

    pooled = pl.pallas_call(
        functools.partial(stem_gap_kernel, S=S, TS=TS),
        out_shape=jax.ShapeDtypeStruct((B, 1, STEM_C), jnp.float32),
        grid_spec=pltpu.PrefetchScalarGridSpec(
            num_scalar_prefetch=0,
            grid=(B, n_chunks),
            in_specs=[
                pl.BlockSpec((1, TS, K), lambda b, j: (b, j, 0)),
                pl.BlockSpec((K, STEM_C), lambda b, j: (0, 0)),
                pl.BlockSpec((1, STEM_C), lambda b, j: (0, 0)),
            ],
            out_specs=pl.BlockSpec((1, 1, STEM_C), lambda b, j: (b, 0, 0)),
            scratch_shapes=[pltpu.VMEM((1, STEM_C), jnp.float32)],
        ),
        compiler_params=pltpu.CompilerParams(
            dimension_semantics=("parallel", "arbitrary"),
            vmem_limit_bytes=32 * 1024 * 1024,
        ),
    )(patches_bf16, stem_w, stem_b)
    pooled = pooled[:, 0, :]                     # [B, STEM_C]

    # Exact fusion of the seq_len==1 attention: attn = (x@Wv + bv)@Wo + bo
    #                                                = x@(Wv@Wo) + (bv@Wo + bo)
    vo_w = jnp.dot(params["v_w"], params["o_w"])
    vo_b = jnp.dot(params["v_b"], params["o_w"]) + params["o_b"]

    # Pad batch rows to a full sublane tile for the tiny head kernel.
    B_pad = max(8, _round_up(B, 8))
    pooled_p = jnp.pad(pooled, ((0, B_pad - B), (0, 0)))

    num_classes = params["c_w"].shape[1]
    head_inputs = [pooled_p,
                   params["proj_w"], params["proj_b"],
                   vo_w, vo_b,
                   params["ln_w"], params["ln_b"],
                   params["f1_w"], params["f1_b"],
                   params["f2_w"], params["f2_b"],
                   params["c_w"], params["c_b"]]

    logits_p = pl.pallas_call(
        head_kernel,
        out_shape=jax.ShapeDtypeStruct((B_pad, num_classes), jnp.float32),
        in_specs=[_full_spec(a.shape) for a in head_inputs],
        out_specs=_full_spec((B_pad, num_classes)),
    )(*head_inputs)
    return logits_p[:B]


if __name__ == "__main__":
    key = jax.random.PRNGKey(0)
    k_x, k_p = jax.random.split(key)

    # small image batch, NCHW like PyTorch
    x = jax.random.normal(k_x, (2, 3, 16, 16), jnp.float32)
    params = init_params(k_p)

    logits = regnet_with_attention_forward(x, params)
    jax.block_until_ready(logits)
    assert logits.shape == (2, NUM_CLASSES), logits.shape
    print("KERNEL_OK")
</pallas_src>

<mosaic_0001>
module attributes {stable_mosaic.version = 11 : i64} {
  func.func @stem_gap_kernel(%arg0: i32, %arg1: i32, %arg2: memref<1x64x27xbf16, #tpu.memory_space<vmem>>, %arg3: memref<27x32xbf16, #tpu.memory_space<vmem>>, %arg4: memref<1x32xf32, #tpu.memory_space<vmem>>, %arg5: memref<1x1x32xf32, #tpu.memory_space<vmem>>, %arg6: memref<1x32xf32, #tpu.memory_space<vmem>>) attributes {dimension_semantics = [#tpu.dimension_semantics<parallel>, #tpu.dimension_semantics<arbitrary>], iteration_bounds = array<i64: 2, 1>, scalar_prefetch = 0 : i64, scratch_operands = 1 : i64, tpu.core_type = #tpu.core_type<tc>, window_params = [{transform_indices = @transform_0, window_bounds = array<i64: 1, 64, 27>}, {pipeline_mode = #tpu.pipeline_mode<synchronous>, transform_indices = @transform_1, window_bounds = array<i64: 27, 32>}, {pipeline_mode = #tpu.pipeline_mode<synchronous>, transform_indices = @transform_2, window_bounds = array<i64: 1, 32>}, {transform_indices = @transform_3, window_bounds = array<i64: 1, 1, 32>}]} {
    %c0_i32 = arith.constant 0 : i32
    %0 = arith.cmpi eq, %arg1, %c0_i32 : i32
    %1 = arith.extui %0 : i1 to i32
    %c0_i32_0 = arith.constant 0 : i32
    %2 = arith.cmpi ne, %1, %c0_i32_0 : i32
    scf.if %2 {
      %cst_17 = arith.constant 0.000000e+00 : f32
      %30 = vector.broadcast %cst_17 : f32 to vector<1x32xf32>
      %c0_18 = arith.constant 0 : index
      %c0_19 = arith.constant 0 : index
      %31 = vector.load %arg6[%c0_18, %c0_19] : memref<1x32xf32, #tpu.memory_space<vmem>>, vector<1x32xf32>
      tpu.vector_store %arg6[%c0_18, %c0_19], %30 {strides = array<i32>} : memref<1x32xf32, #tpu.memory_space<vmem>>, vector<1x32xf32>,
    } else {
    }
    %c0 = arith.constant 0 : index
    %c0_1 = arith.constant 0 : index
    %c0_2 = arith.constant 0 : index
    %3 = vector.load %arg2[%c0, %c0_1, %c0_2] : memref<1x64x27xbf16, #tpu.memory_space<vmem>>, vector<1x64x27xbf16>
    %4 = vector.shape_cast %3 : vector<1x64x27xbf16> to vector<64x27xbf16>
    %c0_3 = arith.constant 0 : index
    %c0_4 = arith.constant 0 : index
    %5 = vector.load %arg3[%c0_3, %c0_4] : memref<27x32xbf16, #tpu.memory_space<vmem>>, vector<27x32xbf16>
    %cst = arith.constant dense<0.000000e+00> : vector<64x32xf32>
    %6 = tpu.matmul %4, %5, %cst {dimension_numbers = #tpu.dot_dimension_numbers<[1], [0], [0], [1], [0, 0, 1, 1], [], []>} : vector<64x27xbf16>, vector<27x32xbf16>, vector<64x32xf32> -> vector<64x32xf32>
    %c0_5 = arith.constant 0 : index
    %c0_6 = arith.constant 0 : index
    %7 = vector.load %arg4[%c0_5, %c0_6] : memref<1x32xf32, #tpu.memory_space<vmem>>, vector<1x32xf32>
    %8 = vector.broadcast %7 : vector<1x32xf32> to vector<64x32xf32>
    %9 = arith.addf %6, %8 : vector<64x32xf32>
    %cst_7 = arith.constant 0.000000e+00 : f32
    %10 = vector.broadcast %cst_7 : f32 to vector<64x32xf32>
    %11 = arith.maximumf %9, %10 : vector<64x32xf32>
    %c64_i32 = arith.constant 64 : i32
    %12 = arith.muli %arg1, %c64_i32 : i32
    %13 = tpu.iota {dimensions = array<i32: 0>} : vector<64x1xi32>
    %14 = vector.broadcast %12 : i32 to vector<64x1xi32>
    %15 = arith.addi %14, %13 : vector<64x1xi32>
    %c64_i32_8 = arith.constant 64 : i32
    %16 = vector.broadcast %c64_i32_8 : i32 to vector<64x1xi32>
    %17 = arith.cmpi slt, %15, %16 : vector<64x1xi32>
    %cst_9 = arith.constant 0.000000e+00 : f32
    %18 = vector.shape_cast %17 : vector<64x1xi1> to vector<64x1xi1>
    %19 = vector.broadcast %18 : vector<64x1xi1> to vector<64x32xi1>
    %20 = vector.broadcast %cst_9 : f32 to vector<64x32xf32>
    %21 = arith.select %19, %11, %20 : vector<64x32xi1>, vector<64x32xf32>
    %c0_10 = arith.constant 0 : index
    %c0_11 = arith.constant 0 : index
    %22 = vector.load %arg6[%c0_10, %c0_11] : memref<1x32xf32, #tpu.memory_space<vmem>>, vector<1x32xf32>
    %cst_12 = arith.constant dense<0.000000e+00> : vector<32xf32>
    %23 = vector.multi_reduction <add>, %21, %cst_12 [0] : vector<64x32xf32> to vector<32xf32>
    %24 = vector.shape_cast %23 : vector<32xf32> to vector<1x32xf32>
    %25 = arith.addf %22, %24 : vector<1x32xf32>
    %c0_13 = arith.constant 0 : index
    %c0_14 = arith.constant 0 : index
    %26 = vector.load %arg6[%c0_13, %c0_14] : memref<1x32xf32, #tpu.memory_space<vmem>>, vector<1x32xf32>
    tpu.vector_store %arg6[%c0_13, %c0_14], %25 {strides = array<i32>} : memref<1x32xf32, #tpu.memory_space<vmem>>, vector<1x32xf32>,
    %c0_i32_15 = arith.constant 0 : i32
    %27 = arith.cmpi eq, %arg1, %c0_i32_15 : i32
    %28 = arith.extui %27 : i1 to i32
    %c0_i32_16 = arith.constant 0 : i32
    %29 = arith.cmpi ne, %28, %c0_i32_16 : i32
    scf.if %29 {
      %c0_17 = arith.constant 0 : index
      %c0_18 = arith.constant 0 : index
      %30 = vector.load %arg6[%c0_17, %c0_18] : memref<1x32xf32, #tpu.memory_space<vmem>>, vector<1x32xf32>
      %cst_19 = arith.constant 1.562500e-02 : f32
      %31 = vector.broadcast %cst_19 : f32 to vector<1x32xf32>
      %32 = arith.mulf %30, %31 : vector<1x32xf32>
      %33 = vector.shape_cast %32 : vector<1x32xf32> to vector<1x1x32xf32>
      %c0_20 = arith.constant 0 : index
      %c0_21 = arith.constant 0 : index
      %c0_22 = arith.constant 0 : index
      %34 = vector.load %arg5[%c0_20, %c0_21, %c0_22] : memref<1x1x32xf32, #tpu.memory_space<vmem>>, vector<1x1x32xf32>
      tpu.vector_store %arg5[%c0_20, %c0_21, %c0_22], %33 {strides = array<i32>} : memref<1x1x32xf32, #tpu.memory_space<vmem>>, vector<1x1x32xf32>,
    } else {
    }
    return
  }
  func.func @transform_0(%arg0: i32, %arg1: i32) -> (i32, i32, i32) {
    %c0_i32 = arith.constant 0 : i32
    %c0_i32_0 = arith.constant 0 : i32
    return %arg0, %arg1, %c0_i32 : i32, i32, i32
  }
  func.func @transform_1(%arg0: i32, %arg1: i32) -> (i32, i32) {
    %c0_i32 = arith.constant 0 : i32
    %c0_i32_0 = arith.constant 0 : i32
    %c0_i32_1 = arith.constant 0 : i32
    return %c0_i32, %c0_i32_0 : i32, i32
  }
  func.func @transform_2(%arg0: i32, %arg1: i32) -> (i32, i32) {
    %c0_i32 = arith.constant 0 : i32
    %c0_i32_0 = arith.constant 0 : i32
    %c0_i32_1 = arith.constant 0 : i32
    return %c0_i32, %c0_i32_0 : i32, i32
  }
  func.func @transform_3(%arg0: i32, %arg1: i32) -> (i32, i32, i32) {
    %c0_i32 = arith.constant 0 : i32
    %c0_i32_0 = arith.constant 0 : i32
    %c0_i32_1 = arith.constant 0 : i32
    return %arg0, %c0_i32, %c0_i32_0 : i32, i32, i32
  }
}

module attributes {stable_mosaic.version = 11 : i64} {
  func.func @head_kernel(%arg0: memref<8x32xf32, #tpu.memory_space<vmem>>, %arg1: memref<32x256xf32, #tpu.memory_space<vmem>>, %arg2: memref<1x256xf32, #tpu.memory_space<vmem>>, %arg3: memref<256x256xf32, #tpu.memory_space<vmem>>, %arg4: memref<1x256xf32, #tpu.memory_space<vmem>>, %arg5: memref<1x256xf32, #tpu.memory_space<vmem>>, %arg6: memref<1x256xf32, #tpu.memory_space<vmem>>, %arg7: memref<256x1024xf32, #tpu.memory_space<vmem>>, %arg8: memref<1x1024xf32, #tpu.memory_space<vmem>>, %arg9: memref<1024x256xf32, #tpu.memory_space<vmem>>, %arg10: memref<1x256xf32, #tpu.memory_space<vmem>>, %arg11: memref<256x10xf32, #tpu.memory_space<vmem>>, %arg12: memref<1x10xf32, #tpu.memory_space<vmem>>, %arg13: memref<8x10xf32, #tpu.memory_space<vmem>>) attributes {dimension_semantics = [], scalar_prefetch = 0 : i64, scratch_operands = 0 : i64, tpu.core_type = #tpu.core_type<tc>} {
    %c0 = arith.constant 0 : index
    %c0_0 = arith.constant 0 : index
    %0 = vector.load %arg0[%c0, %c0_0] : memref<8x32xf32, #tpu.memory_space<vmem>>, vector<8x32xf32>
    %c0_1 = arith.constant 0 : index
    %c0_2 = arith.constant 0 : index
    %1 = vector.load %arg1[%c0_1, %c0_2] : memref<32x256xf32, #tpu.memory_space<vmem>>, vector<32x256xf32>
    %cst = arith.constant dense<0.000000e+00> : vector<8x256xf32>
    %2 = tpu.matmul %0, %1, %cst {dimension_numbers = #tpu.dot_dimension_numbers<[1], [0], [0], [1], [0, 0, 1, 1], [], []>} : vector<8x32xf32>, vector<32x256xf32>, vector<8x256xf32> -> vector<8x256xf32>
    %c0_3 = arith.constant 0 : index
    %c0_4 = arith.constant 0 : index
    %3 = vector.load %arg2[%c0_3, %c0_4] : memref<1x256xf32, #tpu.memory_space<vmem>>, vector<1x256xf32>
    %4 = vector.broadcast %3 : vector<1x256xf32> to vector<8x256xf32>
    %5 = arith.addf %2, %4 : vector<8x256xf32>
    %c0_5 = arith.constant 0 : index
    %c0_6 = arith.constant 0 : index
    %6 = vector.load %arg3[%c0_5, %c0_6] : memref<256x256xf32, #tpu.memory_space<vmem>>, vector<256x256xf32>
    %cst_7 = arith.constant dense<0.000000e+00> : vector<8x256xf32>
    %7 = tpu.matmul %5, %6, %cst_7 {dimension_numbers = #tpu.dot_dimension_numbers<[1], [0], [0], [1], [0, 0, 1, 1], [], []>} : vector<8x256xf32>, vector<256x256xf32>, vector<8x256xf32> -> vector<8x256xf32>
    %c0_8 = arith.constant 0 : index
    %c0_9 = arith.constant 0 : index
    %8 = vector.load %arg4[%c0_8, %c0_9] : memref<1x256xf32, #tpu.memory_space<vmem>>, vector<1x256xf32>
    %9 = vector.broadcast %8 : vector<1x256xf32> to vector<8x256xf32>
    %10 = arith.addf %7, %9 : vector<8x256xf32>
    %11 = arith.addf %5, %10 : vector<8x256xf32>
    %cst_10 = arith.constant dense<0.000000e+00> : vector<8xf32>
    %12 = vector.multi_reduction <add>, %11, %cst_10 [1] : vector<8x256xf32> to vector<8xf32>
    %13 = vector.shape_cast %12 : vector<8xf32> to vector<8x1xf32>
    %cst_11 = arith.constant 2.560000e+02 : f32
    %14 = vector.broadcast %cst_11 : f32 to vector<8x1xf32>
    %15 = arith.divf %13, %14 : vector<8x1xf32>
    %16 = vector.broadcast %15 : vector<8x1xf32> to vector<8x256xf32>
    %17 = arith.subf %11, %16 : vector<8x256xf32>
    %18 = arith.mulf %17, %17 : vector<8x256xf32>
    %cst_12 = arith.constant dense<0.000000e+00> : vector<8xf32>
    %19 = vector.multi_reduction <add>, %18, %cst_12 [1] : vector<8x256xf32> to vector<8xf32>
    %20 = vector.shape_cast %19 : vector<8xf32> to vector<8x1xf32>
    %cst_13 = arith.constant 2.560000e+02 : f32
    %21 = vector.broadcast %cst_13 : f32 to vector<8x1xf32>
    %22 = arith.divf %20, %21 : vector<8x1xf32>
    %23 = vector.broadcast %15 : vector<8x1xf32> to vector<8x256xf32>
    %24 = arith.subf %11, %23 : vector<8x256xf32>
    %cst_14 = arith.constant 9.99999974E-6 : f32
    %25 = vector.broadcast %cst_14 : f32 to vector<8x1xf32>
    %26 = arith.addf %22, %25 : vector<8x1xf32>
    %27 = math.rsqrt %26 : vector<8x1xf32>
    %28 = vector.broadcast %27 : vector<8x1xf32> to vector<8x256xf32>
    %29 = arith.mulf %24, %28 : vector<8x256xf32>
    %c0_15 = arith.constant 0 : index
    %c0_16 = arith.constant 0 : index
    %30 = vector.load %arg5[%c0_15, %c0_16] : memref<1x256xf32, #tpu.memory_space<vmem>>, vector<1x256xf32>
    %31 = vector.broadcast %30 : vector<1x256xf32> to vector<8x256xf32>
    %32 = arith.mulf %29, %31 : vector<8x256xf32>
    %c0_17 = arith.constant 0 : index
    %c0_18 = arith.constant 0 : index
    %33 = vector.load %arg6[%c0_17, %c0_18] : memref<1x256xf32, #tpu.memory_space<vmem>>, vector<1x256xf32>
    %34 = vector.broadcast %33 : vector<1x256xf32> to vector<8x256xf32>
    %35 = arith.addf %32, %34 : vector<8x256xf32>
    %c0_19 = arith.constant 0 : index
    %c0_20 = arith.constant 0 : index
    %36 = vector.load %arg7[%c0_19, %c0_20] : memref<256x1024xf32, #tpu.memory_space<vmem>>, vector<256x1024xf32>
    %cst_21 = arith.constant dense<0.000000e+00> : vector<8x1024xf32>
    %37 = tpu.matmul %35, %36, %cst_21 {dimension_numbers = #tpu.dot_dimension_numbers<[1], [0], [0], [1], [0, 0, 1, 1], [], []>} : vector<8x256xf32>, vector<256x1024xf32>, vector<8x1024xf32> -> vector<8x1024xf32>
    %c0_22 = arith.constant 0 : index
    %c0_23 = arith.constant 0 : index
    %38 = vector.load %arg8[%c0_22, %c0_23] : memref<1x1024xf32, #tpu.memory_space<vmem>>, vector<1x1024xf32>
    %39 = vector.broadcast %38 : vector<1x1024xf32> to vector<8x1024xf32>
    %40 = arith.addf %37, %39 : vector<8x1024xf32>
    %cst_24 = arith.constant 0.000000e+00 : f32
    %41 = vector.broadcast %cst_24 : f32 to vector<8x1024xf32>
    %42 = arith.maximumf %40, %41 : vector<8x1024xf32>
    %c0_25 = arith.constant 0 : index
    %c0_26 = arith.constant 0 : index
    %43 = vector.load %arg9[%c0_25, %c0_26] : memref<1024x256xf32, #tpu.memory_space<vmem>>, vector<1024x256xf32>
    %cst_27 = arith.constant dense<0.000000e+00> : vector<8x256xf32>
    %44 = tpu.matmul %42, %43, %cst_27 {dimension_numbers = #tpu.dot_dimension_numbers<[1], [0], [0], [1], [0, 0, 1, 1], [], []>} : vector<8x1024xf32>, vector<1024x256xf32>, vector<8x256xf32> -> vector<8x256xf32>
    %c0_28 = arith.constant 0 : index
    %c0_29 = arith.constant 0 : index
    %45 = vector.load %arg10[%c0_28, %c0_29] : memref<1x256xf32, #tpu.memory_space<vmem>>, vector<1x256xf32>
    %46 = vector.broadcast %45 : vector<1x256xf32> to vector<8x256xf32>
    %47 = arith.addf %44, %46 : vector<8x256xf32>
    %c0_30 = arith.constant 0 : index
    %c0_31 = arith.constant 0 : index
    %48 = vector.load %arg11[%c0_30, %c0_31] : memref<256x10xf32, #tpu.memory_space<vmem>>, vector<256x10xf32>
    %cst_32 = arith.constant dense<0.000000e+00> : vector<8x10xf32>
    %49 = tpu.matmul %47, %48, %cst_32 {dimension_numbers = #tpu.dot_dimension_numbers<[1], [0], [0], [1], [0, 0, 1, 1], [], []>} : vector<8x256xf32>, vector<256x10xf32>, vector<8x10xf32> -> vector<8x10xf32>
    %c0_33 = arith.constant 0 : index
    %c0_34 = arith.constant 0 : index
    %50 = vector.load %arg12[%c0_33, %c0_34] : memref<1x10xf32, #tpu.memory_space<vmem>>, vector<1x10xf32>
    %51 = vector.broadcast %50 : vector<1x10xf32> to vector<8x10xf32>
    %52 = arith.addf %49, %51 : vector<8x10xf32>
    %c0_35 = arith.constant 0 : index
    %c0_36 = arith.constant 0 : index
    %53 = vector.load %arg13[%c0_35, %c0_36] : memref<8x10xf32, #tpu.memory_space<vmem>>, vector<8x10xf32>
    tpu.vector_store %arg13[%c0_35, %c0_36], %52 {strides = array<i32>} : memref<8x10xf32, #tpu.memory_space<vmem>>, vector<8x10xf32>,
    return
  }
}

</mosaic_0001>

<llo_original>
// kernel: regnet_with_attention_forward.2
$region0: #{regnet_with_attention_forward.2}
  #allocation0 [shape = 'u32[]', space=smem, size = 0x4, offset = 0x4, fixed_abs, tag = 'smem constant byte address 0x4 - core index']
  #allocation1 [shape = 'u32[144,128]{1,0:T(1,128)}', space=vmem, size = 0x12000, scoped, tag = 'internal scratch']
  #allocation2 [shape = 'f32[1,32]{1,0:T(1,128)}', space=vmem, size = 0x200, scoped, tag = 'scratch operand']
  %s0 = inlined_call_operand.vmem [shape: bf16[2,64,27], index: 0, kind: input, shape index: {}]
  %s1 = inlined_call_operand.vmem [shape: bf16[27,32], index: 1, kind: input, shape index: {}]
  %s2 = inlined_call_operand.hbm [shape: f32[1,32], index: 2, kind: input, shape index: {}]
  %s3 = inlined_call_operand.vmem [shape: f32[2,1,32], index: 3, kind: output, shape index: {}]
  %s4 = sld [smem:[#allocation0]]
  $region57: #{regnet_with_attention_forward.2} parent=0
    _
  %s6 = ssub.s32 1, %s4
  %s7 = scalar_select 0, %s6, %s4
  $region1: #{regnet_with_attention_forward.2} parent=0
    #allocation3 [shape = 'u8[512]{0}', space=vmem, size = 0x400, scoped, tag = 'input window, operand 2, single buffered']
    #allocation4 [shape = 's32[2]{0}', space=sflag, size = 0x8, scoped, tag = 'scoped memory for regnet_with_attention_forward.2']
    %8 = vsyncpa [#allocation4], 0
    loop: start=0, step=1, limit=4
    $region2: #{regnet_with_attention_forward.2} parent=1 // loop_pre_header
      _
    $region3: #{regnet_with_attention_forward.2} parent=1 // loop_header
      %s10 = sphi 0, %s14
      %p11 = scmp.ge.s32.totalorder %s10, 4
      %s17 = sphi 0, %s29
      %s18 = sphi 0, %s25
      %s19 = sphi 0, %s17
      %s20 = sphi 0, %s18
      %s21 = sphi 0, %s19
      %s22 = sphi 0, %s20
      %s34 = sphi 0, %s36
      %s37 = sphi 0, %s34
      %s38 = sphi 0, %s37
      %s54 = sphi 0, %s38
      %s58 = sphi 0, %s58
      %s60 = sphi 0, %s58
      %s61 = sphi 0, %s60
      %s75 = sphi 0, %s61
      %s79 = sphi 0, %s79
      %s81 = sphi 0, %s79
      %s82 = sphi 0, %s81
      %s96 = sphi 0, %s82
      %s102 = sphi 0, %s104
      %s105 = sphi 0, %s102
      %s106 = sphi 0, %s105
      %s122 = sphi 0, %s106
    $region4: #{regnet_with_attention_forward.2} parent=1 // loop_header_branch
      %13 = sbr.rel (%p11) target = $region8
    $region5: #{regnet_with_attention_forward.2} parent=1 // loop_body
      %s15 = ssub.s32 %s10, 1
      %s16 = ssub.s32 %s10, 2
      %s23 = sadd.s32 1, %s18
      %p24 = scmp.ge.s32.totalorder %s23, 1
      %s25 = scalar_select %p24, 0, %s23
      %s26 = sadd.s32 1, %s17
      %s27 = scalar_select %p24, %s26, %s17
      %p28 = scmp.ge.s32.totalorder %s27, 2
      %s29 = scalar_select %p28, 0, %s27
      %s30 = ssub.s32 %s17, %s29
      %s31 = ssub.s32 %s18, %s25
      %s32 = sor.u32 %s30, %s31
      %p33 = scmp.eq.s32.totalorder %s32, 0
      %s35 = sadd.s32 %s34, 1
      %s36 = scalar_select %p33, %s34, %s35
      %p39 = pneg %p33
      %p40 = scmp.eq.s32.totalorder %s10, 1
      %p41 = por %p39, %p40
      %p42 = scmp.ne.s32.totalorder %s34, %s37
      %p43 = scmp.eq.s32.totalorder %s10, 0
      %p44 = por %p42, %p43
      %p45 = scmp.ne.s32.totalorder %s34, %s37
      %p46 = scmp.eq.s32.totalorder %s15, 1
      %p47 = por %p45, %p46
      %p48 = scmp.ne.s32.totalorder %s37, %s38
      %p49 = scmp.eq.s32.totalorder %s15, 0
      %p50 = por %p48, %p49
      %p51 = scmp.ne.s32.totalorder %s37, %s38
      %p52 = scmp.eq.s32.totalorder %s16, 1
      %p53 = por %p51, %p52
      %p55 = scmp.ne.s32.totalorder %s38, %s54
      %p56 = scmp.eq.s32.totalorder %s16, 0
      %p57 = por %p55, %p56
      %s59 = sadd.s32 %s58, 1
      %p62 = scmp.eq.s32.totalorder %s10, 1
      %p63 = scmp.ne.s32.totalorder %s58, %s60
      %p64 = scmp.eq.s32.totalorder %s10, 0
      %p65 = por %p63, %p64
      %p66 = scmp.ne.s32.totalorder %s58, %s60
      %p67 = scmp.eq.s32.totalorder %s15, 1
      %p68 = por %p66, %p67
      %p69 = scmp.ne.s32.totalorder %s60, %s61
      %p70 = scmp.eq.s32.totalorder %s15, 0
      %p71 = por %p69, %p70
      %p72 = scmp.ne.s32.totalorder %s60, %s61
      %p73 = scmp.eq.s32.totalorder %s16, 1
      %p74 = por %p72, %p73
      %p76 = scmp.ne.s32.totalorder %s61, %s75
      %p77 = scmp.eq.s32.totalorder %s16, 0
      %p78 = por %p76, %p77
      %s80 = sadd.s32 %s79, 1
      %p83 = scmp.eq.s32.totalorder %s10, 1
      %p84 = scmp.ne.s32.totalorder %s79, %s81
      %p85 = scmp.eq.s32.totalorder %s10, 0
      %p86 = por %p84, %p85
      %p87 = scmp.ne.s32.totalorder %s79, %s81
      %p88 = scmp.eq.s32.totalorder %s15, 1
      %p89 = por %p87, %p88
      %p90 = scmp.ne.s32.totalorder %s81, %s82
      %p91 = scmp.eq.s32.totalorder %s15, 0
      %p92 = por %p90, %p91
      %p93 = scmp.ne.s32.totalorder %s81, %s82
      %p94 = scmp.eq.s32.totalorder %s16, 1
      %p95 = por %p93, %p94
      %p97 = scmp.ne.s32.totalorder %s82, %s96
      %p98 = scmp.eq.s32.totalorder %s16, 0
      %p99 = por %p97, %p98
      %s100 = ssub.s32 %s17, %s29
      %p101 = scmp.eq.s32.totalorder %s100, 0
      %s103 = sadd.s32 %s102, 1
      %s104 = scalar_select %p101, %s102, %s103
      %p107 = pneg %p101
      %p108 = scmp.eq.s32.totalorder %s10, 1
      %p109 = por %p107, %p108
      %p110 = scmp.ne.s32.totalorder %s102, %s105
      %p111 = scmp.eq.s32.totalorder %s10, 0
      %p112 = por %p110, %p111
      %p113 = scmp.ne.s32.totalorder %s102, %s105
      %p114 = scmp.eq.s32.totalorder %s15, 1
      %p115 = por %p113, %p114
      %p116 = scmp.ne.s32.totalorder %s105, %s106
      %p117 = scmp.eq.s32.totalorder %s15, 0
      %p118 = por %p116, %p117
      %p119 = scmp.ne.s32.totalorder %s105, %s106
      %p120 = scmp.eq.s32.totalorder %s16, 1
      %p121 = por %p119, %p120
      %p123 = scmp.ne.s32.totalorder %s106, %s122
      %p124 = scmp.eq.s32.totalorder %s16, 0
      %p125 = por %p123, %p124
      %p126 = scmp.le.s32.totalorder 1, %s10
      %p127 = scmp.lt.s32.totalorder %s10, 3
      %p128 = pnand %p126, %p127
      %p129 = pneg %p128
      // Predicated region
      $region9: #{regnet_with_attention_forward.2} parent=5 // pred_check
        _
      $region10: #{regnet_with_attention_forward.2} parent=5 // pred_check_branch
        %131 = sbr.rel (%p128) target = $region12
      $region11: #{regnet_with_attention_forward.2} parent=5 // pred_region
        %s132 = ssub.s32 %s10, 1
        // Predicated region
        $region13: #{regnet_with_attention_forward.2} parent=11 // pred_check
          %p133 = pneg %p71
        $region14: #{regnet_with_attention_forward.2} parent=11 // pred_check_branch
          %135 = sbr.rel (%p133) target = $region16
        $region15: #{regnet_with_attention_forward.2} parent=11 // pred_region
          _
        $region16: #{regnet_with_attention_forward.2} parent=11 // pred_fallthru
          _
        // Predicated region
        $region17: #{regnet_with_attention_forward.2} parent=11 // pred_check
          %p136 = pneg %p92
        $region18: #{regnet_with_attention_forward.2} parent=11 // pred_check_branch
          %138 = sbr.rel (%p136) target = $region20
        $region19: #{regnet_with_attention_forward.2} parent=11 // pred_region
          %s140 = ssub.s32 16, 16
          %141 = vsyncadd [#allocation4], %s140
          %s143 = sshll.u32 [#allocation3], 4
          %s144 = int_to_ptr.vmem [resolvable:$true] %s143
          %146 = dma.hbm_to_vmem [thread:$0]  %s2, 16, %s144, [#allocation4]
        $region20: #{regnet_with_attention_forward.2} parent=11 // pred_fallthru
          _
      $region12: #{regnet_with_attention_forward.2} parent=5 // pred_fallthru
        _
      %p147 = scmp.lt.s32.totalorder %s10, 2
      // Predicated region
      $region21: #{regnet_with_attention_forward.2} parent=5 // pred_check
        %p148 = pneg %p147
      $region22: #{regnet_with_attention_forward.2} parent=5 // pred_check_branch
        %150 = sbr.rel (%p148) target = $region24
      $region23: #{regnet_with_attention_forward.2} parent=5 // pred_region
        // Predicated region
        $region25: #{regnet_with_attention_forward.2} parent=23 // pred_check
          %p151 = pneg %p44
        $region26: #{regnet_with_attention_forward.2} parent=23 // pred_check_branch
          %153 = sbr.rel (%p151) target = $region28
        $region27: #{regnet_with_attention_forward.2} parent=23 // pred_region
          %s154 = smul.u32 8, %s18
          %p155 = scmp.lt.s32.totalorder %s17, 1
          %s156 = scalar_select %p155, %s17, 1
          %p157 = scmp.lt.s32.totalorder %s154, 7
          %s158 = scalar_select %p157, %s154, 7
          %s159 = smul.addr %s156, 8
          %s160 = sadd.s32 %s158, %s159
          %s161 = smul.addr %s160, 4
          %s162 = scalar_lea.vmem %s0, %s161
          %s163 = smul.u32 8, %s18
        $region28: #{regnet_with_attention_forward.2} parent=23 // pred_fallthru
          _
      $region24: #{regnet_with_attention_forward.2} parent=5 // pred_fallthru
        _
      %p164 = scmp.le.s32.totalorder 1, %s10
      %p165 = scmp.lt.s32.totalorder %s10, 3
      %p166 = pnand %p164, %p165
      %p167 = pneg %p166
      // Predicated region
      $region29: #{regnet_with_attention_forward.2} parent=5 // pred_check
        _
      $region30: #{regnet_with_attention_forward.2} parent=5 // pred_check_branch
        %169 = sbr.rel (%p166) target = $region32
      $region31: #{regnet_with_attention_forward.2} parent=5 // pred_region
        %s170 = ssub.s32 %s10, 1
        // Predicated region
        $region33: #{regnet_with_attention_forward.2} parent=31 // pred_check
          %p171 = pneg %p92
        $region34: #{regnet_with_attention_forward.2} parent=31 // pred_check_branch
          %173 = sbr.rel (%p171) target = $region36
        $region35: #{regnet_with_attention_forward.2} parent=31 // pred_region
          %174 = dma.done [#allocation4], 16
        $region36: #{regnet_with_attention_forward.2} parent=31 // pred_fallthru
          _
        %s175 = smul.u32 8, %s20
        %p176 = scmp.lt.s32.totalorder %s19, 1
        %s177 = scalar_select %p176, %s19, 1
        %p178 = scmp.lt.s32.totalorder %s175, 7
        %s179 = scalar_select %p178, %s175, 7
        %s180 = smul.addr %s177, 8
        %s181 = sadd.s32 %s179, %s180
        %s182 = smul.addr %s181, 4
        %s183 = scalar_lea.vmem %s0, %s182
        %p184 = pneg %p50
        %p185 = pneg %p47
        %p186 = pneg %p71
        %p187 = pneg %p68
        %p188 = pneg %p92
        %p189 = pneg %p89
        %p190 = pneg %p118
        %p191 = pneg %p115
        %p192 = scmp.lt.s32.totalorder %s19, 1
        %s193 = scalar_select %p192, %s19, 1
        %s194 = scalar_lea.vmem %s3, %s193
        %s195 = smul.u32 8, %s20
        %p196 = scmp.lt.s32.totalorder %s19, 1
        %s197 = scalar_select %p196, %s19, 1
        %p198 = scmp.lt.s32.totalorder %s195, 7
        %s199 = scalar_select %p198, %s195, 7
        %s200 = smul.addr %s197, 8
        %s201 = sadd.s32 %s199, %s200
        %s202 = smul.addr %s201, 4
        %s203 = scalar_lea.vmem %s0, %s202
        %s204 = smul.u32 8, %s20
        %p205 = scmp.lt.s32.totalorder %s19, 1
        %s206 = scalar_select %p205, %s19, 1
        %s207 = scalar_lea.vmem %s3, %s206
        %p209 = scmp.eq.s32.totalorder %s20, 0
        // Predicated region
        $region37: #{regnet_with_attention_forward.2} parent=31 // pred_check
          %p210 = pneg %p209
        $region38: #{regnet_with_attention_forward.2} parent=31 // pred_check_branch
          %212 = sbr.rel (%p210) target = $region40
        $region39: #{regnet_with_attention_forward.2} parent=31 // pred_region
          %vm213 = vcmask 253952
          %214 = vst.msk [vmem:[#allocation2] sm:$0x1] %vm213, 0.0
        $region40: #{regnet_with_attention_forward.2} parent=31 // pred_fallthru
          _
        %v215 = vld [vmem:[%s203] sm:$0xf]
        %v216 = vld [vmem:[%s203 + $0x4] sm:$0xf]
        %v217 = vld [vmem:[%s203 + $0x8] sm:$0xf]
        %v218 = vld [vmem:[%s203 + $0xc] sm:$0xf]
        %v219 = vld [vmem:[%s203 + $0x10] sm:$0xf]
        %v220 = vld [vmem:[%s203 + $0x14] sm:$0xf]
        %v221 = vld [vmem:[%s203 + $0x18] sm:$0xf]
        %v222 = vld [vmem:[%s203 + $0x1c] sm:$0xf]
        %v223 = vld [vmem:[%s1] sm:$0xf]
        %v224 = vld [vmem:[%s1 + $0x4] sm:$0xf]
        %v225 = vld [vmem:[%s1 + $0x8] sm:$0xf]
        %v226 = vld [vmem:[%s1 + $0xc] sm:$0x3]
        %v227 = vld [vmem:[#allocation3] sm:$0x1]
        %v229 = vlaneseq
        %v230 = vshrl.u32 %v229, 7
        %v231 = vsub.s32 0, %v230
        %v232 = vrot.slane %v227, %v231
        %v242 = vunpack.c.l.b16 %v215
        %v243 = vunpack.c.l.b16 %v216
        %v244 = vunpack.c.l.b16 %v217
        %v245 = vunpack.c.l.b16 %v218
        %v246 = vunpack.c.l.b16 %v219
        %v247 = vunpack.c.l.b16 %v220
        %v248 = vunpack.c.l.b16 %v221
        %v249 = vunpack.c.l.b16 %v222
        %v250 = vpack.c.b16 %v243, %v242
        %v251 = vpack.c.b16 %v245, %v244
        %v252 = vpack.c.b16 %v247, %v246
        %v253 = vpack.c.b16 %v249, %v248
        %v258 = vunpack.c.l.b16 %v223
        %v259 = vunpack.c.l.b16 %v224
        %v260 = vunpack.c.l.b16 %v225
        %v261 = vunpack.c.l.b16 %v226
        %v262 = vpack.c.b16 %v259, %v258
        %v263 = vpack.c.b16 %v261, %v260
        %vm265 = vcmask 220160
        %v267 = vsel %vm265, %v250, 0
        %v270 = vsel %vm265, %v251, 0
        %v273 = vsel %vm265, %v252, 0
        %v276 = vsel %vm265, %v253, 0
        %vm278 = vcmask 1044480
        %vm279 = vcmask 1045504
        %v280 = vsel %vm278, 4294967295, 65535
        %v281 = vsel %vm279, %v280, 0
        %v283 = vand.u32 %v263, %v281
        %285 = vmatprep.subr.bf16.mxu0 0
        %286 = vmatpush1.bf16.msra.mxu0 0
        %287 = vmatprep.subr.bf16.mxu0 0
        %288 = vmatpush1.bf16.msra.mxu0 0
        %289 = vmatprep.subr.bf16.mxu0 0
        %290 = vmatpush1.bf16.msra.mxu0 0
        %291 = vmatprep.subr.bf16.mxu0 0
        %292 = vmatpush1.bf16.msra.mxu0 0
        %293 = vmatprep.subr.bf16.mxu0 0
        %294 = vmatpush1.bf16.msra.mxu0 0
        %295 = vmatprep.subr.bf16.mxu0 0
        %296 = vmatpush1.bf16.msra.mxu0 0
        %297 = vmatprep.subr.bf16.mxu0 0
        %298 = vmatpush1.bf16.msra.mxu0 %v283
        %299 = vmatprep.subr.bf16.mxu0 0
        %300 = vmatpush1.bf16.msra.mxu0 %v262
        %301 = vmatprep.subr.bf16.mxu0 0
        %302 = vmatpush2.bf16.msra.mxu0 0
        %303 = vmatprep.subr.bf16.mxu0 0
        %304 = vmatpush2.bf16.msra.mxu0 0
        %305 = vmatprep.subr.bf16.mxu0 0
        %306 = vmatpush2.bf16.msra.mxu0 0
        %307 = vmatprep.subr.bf16.mxu0 0
        %308 = vmatpush2.bf16.msra.mxu0 0
        %309 = vmatprep.subr.bf16.mxu0 0
        %310 = vmatpush2.bf16.msra.mxu0 0
        %311 = vmatprep.subr.bf16.mxu0 0
        %312 = vmatpush2.bf16.msra.mxu0 0
        %313 = vmatprep.subr.bf16.mxu0 0
        %314 = vmatpush2.bf16.msra.mxu0 0
        %315 = vmatprep.subr.bf16.mxu0 0
        %316 = vmatpush2.bf16.msra.mxu0 0
        %317 = vmatprep.mubr.bf16.mxu0 0
        %318 = vmatmul.mubr.bf16.gmra.mxu0 %v267
        %v319 = vpop.f32.mrf.mxu0
        %v320 = vadd.f32 %v232, %v319
        %v321 = vpop.f32.mrf.mxu0
        %v322 = vpop.f32.mrf.mxu0
        %v323 = vadd.f32 %v232, %v322
        %v324 = vpop.f32.mrf.mxu0
        %325 = vmatprep.mubr.bf16.mxu0 0
        %326 = vmatmul.mubr.bf16.gmra.mxu0 %v270
        %v327 = vpop.f32.mrf.mxu0
        %v328 = vadd.f32 %v232, %v327
        %v329 = vpop.f32.mrf.mxu0
        %v330 = vpop.f32.mrf.mxu0
        %v331 = vadd.f32 %v232, %v330
        %v332 = vpop.f32.mrf.mxu0
        %333 = vmatprep.mubr.bf16.mxu0 0
        %334 = vmatmul.mubr.bf16.gmra.mxu0 %v273
        %v335 = vpop.f32.mrf.mxu0
        %v336 = vadd.f32 %v232, %v335
        %v337 = vpop.f32.mrf.mxu0
        %v338 = vpop.f32.mrf.mxu0
        %v339 = vadd.f32 %v232, %v338
        %v340 = vpop.f32.mrf.mxu0
        %341 = vmatprep.mubr.bf16.mxu0 0
        %342 = vmatmul.mubr.bf16.gmra.mxu0 %v276
        %v343 = vpop.f32.mrf.mxu0
        %v344 = vadd.f32 %v232, %v343
        %v345 = vpop.f32.mrf.mxu0
        %v346 = vpop.f32.mrf.mxu0
        %v347 = vadd.f32 %v232, %v346
        %v348 = vpop.f32.mrf.mxu0
        %349 = vdwg.mxu0
        %v350 = vmax.f32 %v320, 0.0
        %v351 = vmax.f32 %v323, 0.0
        %v352 = vmax.f32 %v328, 0.0
        %v353 = vmax.f32 %v331, 0.0
        %v354 = vmax.f32 %v336, 0.0
        %v355 = vmax.f32 %v339, 0.0
        %v356 = vmax.f32 %v344, 0.0
        %v357 = vmax.f32 %v347, 0.0
        %s358 = smul.u32 %s20, 64
        %v359 = vlaneseq
        %v360 = vshrl.u32 %v359, 7
        %v361 = vadd.s32 %v360, 8
        %v362 = vadd.s32 %v360, 16
        %v363 = vadd.s32 %v360, 24
        %v364 = vadd.s32 %v360, 32
        %v365 = vadd.s32 %v360, 40
        %v366 = vadd.s32 %v360, 48
        %v367 = vadd.s32 %v360, 56
        %v368 = vstv %s358
        %v369 = vadd.s32 %v368, %v360
        %v370 = vadd.s32 %v368, %v361
        %v371 = vadd.s32 %v368, %v362
        %v372 = vadd.s32 %v368, %v363
        %v373 = vadd.s32 %v368, %v364
        %v374 = vadd.s32 %v368, %v365
        %v375 = vadd.s32 %v368, %v366
        %v376 = vadd.s32 %v368, %v367
        %vm377 = vcmp.lt.s32.totalorder %v369, 64
        %vm378 = vcmp.lt.s32.totalorder %v370, 64
        %vm379 = vcmp.lt.s32.totalorder %v371, 64
        %vm380 = vcmp.lt.s32.totalorder %v372, 64
        %vm381 = vcmp.lt.s32.totalorder %v373, 64
        %vm382 = vcmp.lt.s32.totalorder %v374, 64
        %vm383 = vcmp.lt.s32.totalorder %v375, 64
        %vm384 = vcmp.lt.s32.totalorder %v376, 64
        %v385 = vsel %vm377, 1, 0
        %v386 = vsel %vm378, 1, 0
        %v387 = vsel %vm379, 1, 0
        %v388 = vsel %vm380, 1, 0
        %v389 = vsel %vm381, 1, 0
        %v390 = vsel %vm382, 1, 0
        %v391 = vsel %vm383, 1, 0
        %v392 = vsel %vm384, 1, 0
        %vm393 = vcmp.eq.s32.totalorder %v385, 1
        %vm394 = vcmp.eq.s32.totalorder %v386, 1
        %vm395 = vcmp.eq.s32.totalorder %v387, 1
        %vm396 = vcmp.eq.s32.totalorder %v388, 1
        %vm397 = vcmp.eq.s32.totalorder %v389, 1
        %vm398 = vcmp.eq.s32.totalorder %v390, 1
        %vm399 = vcmp.eq.s32.totalorder %v391, 1
        %vm400 = vcmp.eq.s32.totalorder %v392, 1
        %v401 = vsel %vm393, %v350, 0.0
        %v402 = vsel %vm394, %v351, 0.0
        %v403 = vsel %vm395, %v352, 0.0
        %v404 = vsel %vm396, %v353, 0.0
        %v405 = vsel %vm397, %v354, 0.0
        %v406 = vsel %vm398, %v355, 0.0
        %v407 = vsel %vm399, %v356, 0.0
        %v408 = vsel %vm400, %v357, 0.0
        %v409 = vld [vmem:[#allocation2] sm:$0x1]
        %vm410 = vcmask 261120
        %v411 = vsel %vm410, %v401, 0.0
        %v412 = vsel %vm410, %v402, 0.0
        %v413 = vadd.f32 %v411, %v412
        %v414 = vsel %vm410, %v403, 0.0
        %v415 = vadd.f32 %v413, %v414
        %v416 = vsel %vm410, %v404, 0.0
        %v417 = vadd.f32 %v415, %v416
        %v418 = vsel %vm410, %v405, 0.0
        %v419 = vadd.f32 %v417, %v418
        %v420 = vsel %vm410, %v406, 0.0
        %v421 = vadd.f32 %v419, %v420
        %v422 = vsel %vm410, %v407, 0.0
        %v423 = vadd.f32 %v421, %v422
        %v424 = vsel %vm410, %v408, 0.0
        %v425 = vadd.f32 %v423, %v424
        %v426 = vrot.slane %v425, 4
        %v427 = vadd.f32 %v425, %v426
        %v428 = vrot.slane %v427, 2
        %v429 = vadd.f32 %v427, %v428
        %v430 = vrot.slane %v429, 1
        %v431 = vadd.f32 %v429, %v430
        %v432 = vadd.f32 %v409, %v431
        %vm433 = vcmask 253952
        %434 = vst.msk [vmem:[#allocation2] sm:$0x1] %vm433, %v432
        // Predicated region
        $region41: #{regnet_with_attention_forward.2} parent=31 // pred_check
          %p435 = pneg %p209
        $region42: #{regnet_with_attention_forward.2} parent=31 // pred_check_branch
          %437 = sbr.rel (%p435) target = $region44
        $region43: #{regnet_with_attention_forward.2} parent=31 // pred_region
          %v438 = vld [vmem:[#allocation2] sm:$0x1]
          %v439 = vmul.f32 %v438, 0.015625
          %440 = vst.msk [vmem:[%s207] sm:$0x1] %vm433, %v439
        $region44: #{regnet_with_attention_forward.2} parent=31 // pred_fallthru
          _
        %p441 = scmp.lt.s32.totalorder %s19, 1
        %s442 = scalar_select %p441, %s19, 1
        %s443 = scalar_lea.vmem %s3, %s442
        // Predicated region
        $region45: #{regnet_with_attention_forward.2} parent=31 // pred_check
          %p444 = pneg %p115
        $region46: #{regnet_with_attention_forward.2} parent=31 // pred_check_branch
          %446 = sbr.rel (%p444) target = $region48
        $region47: #{regnet_with_attention_forward.2} parent=31 // pred_region
          _
        $region48: #{regnet_with_attention_forward.2} parent=31 // pred_fallthru
          _
      $region32: #{regnet_with_attention_forward.2} parent=5 // pred_fallthru
        _
      %p447 = scmp.le.s32.totalorder 2, %s10
      // Predicated region
      $region49: #{regnet_with_attention_forward.2} parent=5 // pred_check
        %p448 = pneg %p447
      $region50: #{regnet_with_attention_forward.2} parent=5 // pred_check_branch
        %450 = sbr.rel (%p448) target = $region52
      $region51: #{regnet_with_attention_forward.2} parent=5 // pred_region
        %s451 = ssub.s32 %s10, 2
        // Predicated region
        $region53: #{regnet_with_attention_forward.2} parent=51 // pred_check
          %p452 = pneg %p121
        $region54: #{regnet_with_attention_forward.2} parent=51 // pred_check_branch
          %454 = sbr.rel (%p452) target = $region56
        $region55: #{regnet_with_attention_forward.2} parent=51 // pred_region
          %p455 = scmp.lt.s32.totalorder %s21, 1
          %s456 = scalar_select %p455, %s21, 1
          %s457 = scalar_lea.vmem %s3, %s456
        $region56: #{regnet_with_attention_forward.2} parent=51 // pred_fallthru
          _
      $region52: #{regnet_with_attention_forward.2} parent=5 // pred_fallthru
        _
    $region6: #{regnet_with_attention_forward.2} parent=1 // loop_footer
      %s14 = sadd.s32 1, %s10
    $region7: #{regnet_with_attention_forward.2} parent=1 // loop_footer_branch
      %9 = sbr.rel target = $region3
    $region8: #{regnet_with_attention_forward.2} parent=1 // loop_exit
      _
    %458 = vsyncpa [#allocation4], 1
    %s459 = scalar_lea.sflag [#allocation4], 1
    %460 = vsyncpa %s459, 1

// kernel: regnet_with_attention_forward.3
$region0: #{regnet_with_attention_forward.3}
  #allocation0 [shape = 'u32[]', space=smem, size = 0x4, offset = 0x4, fixed_abs, tag = 'smem constant byte address 0x4 - core index']
  #allocation1 [shape = 'u32[144,128]{1,0:T(1,128)}', space=vmem, size = 0x12000, scoped, tag = 'internal scratch']
  %s0 = inlined_call_operand.vmem [shape: f32[8,32], index: 0, kind: input, shape index: {}]
  %s1 = inlined_call_operand.vmem [shape: f32[32,256], index: 1, kind: input, shape index: {}]
  %s2 = inlined_call_operand.vmem [shape: f32[1,256], index: 2, kind: input, shape index: {}]
  %s3 = inlined_call_operand.vmem [shape: f32[256,256], index: 3, kind: input, shape index: {}]
  %s4 = inlined_call_operand.vmem [shape: f32[1,256], index: 4, kind: input, shape index: {}]
  %s5 = inlined_call_operand.vmem [shape: f32[1,256], index: 5, kind: input, shape index: {}]
  %s6 = inlined_call_operand.vmem [shape: f32[1,256], index: 6, kind: input, shape index: {}]
  %s7 = inlined_call_operand.vmem [shape: f32[256,1024], index: 7, kind: input, shape index: {}]
  %s8 = inlined_call_operand.vmem [shape: f32[1,1024], index: 8, kind: input, shape index: {}]
  %s9 = inlined_call_operand.vmem [shape: f32[1024,256], index: 9, kind: input, shape index: {}]
  %s10 = inlined_call_operand.vmem [shape: f32[1,256], index: 10, kind: input, shape index: {}]
  %s11 = inlined_call_operand.vmem [shape: f32[256,10], index: 11, kind: input, shape index: {}]
  %s12 = inlined_call_operand.vmem [shape: f32[1,10], index: 12, kind: input, shape index: {}]
  %s13 = inlined_call_operand.vmem [shape: f32[8,10], index: 13, kind: output, shape index: {}]
  %s14 = sld [smem:[#allocation0]]
  $region62: #{regnet_with_attention_forward.3} parent=0
    _
  %s16 = ssub.s32 1, %s14
  %s17 = scalar_select 0, %s16, %s14
  // Predicated region
  $region2: #{regnet_with_attention_forward.3} parent=0 // pred_check
    _
  $region3: #{regnet_with_attention_forward.3} parent=0 // pred_check_branch
    %19 = sbr.rel (0) target = $region5
  $region4: #{regnet_with_attention_forward.3} parent=0 // pred_region
    _
  $region5: #{regnet_with_attention_forward.3} parent=0 // pred_fallthru
    _
  // Predicated region
  $region6: #{regnet_with_attention_forward.3} parent=0 // pred_check
    _
  $region7: #{regnet_with_attention_forward.3} parent=0 // pred_check_branch
    %21 = sbr.rel (0) target = $region9
  $region8: #{regnet_with_attention_forward.3} parent=0 // pred_region
    _
  $region9: #{regnet_with_attention_forward.3} parent=0 // pred_fallthru
    _
  // Predicated region
  $region10: #{regnet_with_attention_forward.3} parent=0 // pred_check
    _
  $region11: #{regnet_with_attention_forward.3} parent=0 // pred_check_branch
    %23 = sbr.rel (0) target = $region13
  $region12: #{regnet_with_attention_forward.3} parent=0 // pred_region
    _
  $region13: #{regnet_with_attention_forward.3} parent=0 // pred_fallthru
    _
  // Predicated region
  $region14: #{regnet_with_attention_forward.3} parent=0 // pred_check
    _
  $region15: #{regnet_with_attention_forward.3} parent=0 // pred_check_branch
    %25 = sbr.rel (0) target = $region17
  $region16: #{regnet_with_attention_forward.3} parent=0 // pred_region
    _
  $region17: #{regnet_with_attention_forward.3} parent=0 // pred_fallthru
    _
  // Predicated region
  $region18: #{regnet_with_attention_forward.3} parent=0 // pred_check
    _
  $region19: #{regnet_with_attention_forward.3} parent=0 // pred_check_branch
    %27 = sbr.rel (0) target = $region21
  $region20: #{regnet_with_attention_forward.3} parent=0 // pred_region
    _
  $region21: #{regnet_with_attention_forward.3} parent=0 // pred_fallthru
    _
  // Predicated region
  $region22: #{regnet_with_attention_forward.3} parent=0 // pred_check
    _
  $region23: #{regnet_with_attention_forward.3} parent=0 // pred_check_branch
    %29 = sbr.rel (0) target = $region25
  $region24: #{regnet_with_attention_forward.3} parent=0 // pred_region
    _
  $region25: #{regnet_with_attention_forward.3} parent=0 // pred_fallthru
    _
  // Predicated region
  $region26: #{regnet_with_attention_forward.3} parent=0 // pred_check
    _
  $region27: #{regnet_with_attention_forward.3} parent=0 // pred_check_branch
    %31 = sbr.rel (0) target = $region29
  $region28: #{regnet_with_attention_forward.3} parent=0 // pred_region
    _
  $region29: #{regnet_with_attention_forward.3} parent=0 // pred_fallthru
    _
  // Predicated region
  $region30: #{regnet_with_attention_forward.3} parent=0 // pred_check
    _
  $region31: #{regnet_with_attention_forward.3} parent=0 // pred_check_branch
    %33 = sbr.rel (0) target = $region33
  $region32: #{regnet_with_attention_forward.3} parent=0 // pred_region
    _
  $region33: #{regnet_with_attention_forward.3} parent=0 // pred_fallthru
    _
  // Predicated region
  $region34: #{regnet_with_attention_forward.3} parent=0 // pred_check
    _
  $region35: #{regnet_with_attention_forward.3} parent=0 // pred_check_branch
    %35 = sbr.rel (0) target = $region37
  $region36: #{regnet_with_attention_forward.3} parent=0 // pred_region
    _
  $region37: #{regnet_with_attention_forward.3} parent=0 // pred_fallthru
    _
  // Predicated region
  $region38: #{regnet_with_attention_forward.3} parent=0 // pred_check
    _
  $region39: #{regnet_with_attention_forward.3} parent=0 // pred_check_branch
    %37 = sbr.rel (0) target = $region41
  $region40: #{regnet_with_attention_forward.3} parent=0 // pred_region
    _
  $region41: #{regnet_with_attention_forward.3} parent=0 // pred_fallthru
    _
  // Predicated region
  $region42: #{regnet_with_attention_forward.3} parent=0 // pred_check
    _
  $region43: #{regnet_with_attention_forward.3} parent=0 // pred_check_branch
    %39 = sbr.rel (0) target = $region45
  $region44: #{regnet_with_attention_forward.3} parent=0 // pred_region
    _
  $region45: #{regnet_with_attention_forward.3} parent=0 // pred_fallthru
    _
  // Predicated region
  $region46: #{regnet_with_attention_forward.3} parent=0 // pred_check
    _
  $region47: #{regnet_with_attention_forward.3} parent=0 // pred_check_branch
    %41 = sbr.rel (0) target = $region49
  $region48: #{regnet_with_attention_forward.3} parent=0 // pred_region
    _
  $region49: #{regnet_with_attention_forward.3} parent=0 // pred_fallthru
    _
  // Predicated region
  $region50: #{regnet_with_attention_forward.3} parent=0 // pred_check
    _
  $region51: #{regnet_with_attention_forward.3} parent=0 // pred_check_branch
    %43 = sbr.rel (0) target = $region53
  $region52: #{regnet_with_attention_forward.3} parent=0 // pred_region
    _
  $region53: #{regnet_with_attention_forward.3} parent=0 // pred_fallthru
    _
  %v44 = vld [vmem:[%s0] sm:$0xff]
  %v45 = vld [vmem:[%s1] sm:$0xff]
  %v46 = vld [vmem:[%s1 + $0x8] sm:$0xff]
  %v47 = vld [vmem:[%s1 + $0x10] sm:$0xff]
  %v48 = vld [vmem:[%s1 + $0x18] sm:$0xff]
  %v49 = vld [vmem:[%s1 + $0x20] sm:$0xff]
  %v50 = vld [vmem:[%s1 + $0x28] sm:$0xff]
  %v51 = vld [vmem:[%s1 + $0x30] sm:$0xff]
  %v52 = vld [vmem:[%s1 + $0x38] sm:$0xff]
  %v53 = vld [vmem:[%s2] sm:$0x3]
  %v55 = vlaneseq
  %v56 = vshrl.u32 %v55, 7
  %v57 = vsub.s32 0, %v56
  %v58 = vrot.slane %v53, %v57
  %v59 = vlaneseq
  %v60 = vshrl.u32 %v59, 7
  %v61 = vsub.s32 1, %v60
  %v62 = vrot.slane %v53, %v61
  %vm65 = vcmask 261120
  %v67 = vsel %vm65, %v44, 0
  %69 = vmatprep.subr.mxu0 0.0
  %70 = vmatpush1.msra.mxu0 0.0
  %71 = vmatprep.subr.mxu0 0.0
  %72 = vmatpush1.msra.mxu0 0.0
  %73 = vmatprep.subr.mxu0 0.0
  %74 = vmatpush1.msra.mxu0 0.0
  %75 = vmatprep.subr.mxu0 0.0
  %76 = vmatpush1.msra.mxu0 0.0
  %77 = vmatprep.subr.mxu0 0.0
  %78 = vmatpush1.msra.mxu0 0.0
  %79 = vmatprep.subr.mxu0 0.0
  %80 = vmatpush1.msra.mxu0 0.0
  %81 = vmatprep.subr.mxu0 0.0
  %82 = vmatpush1.msra.mxu0 0.0
  %83 = vmatprep.subr.mxu0 0.0
  %84 = vmatpush1.msra.mxu0 0.0
  %85 = vmatprep.subr.mxu0 0.0
  %86 = vmatpush1.msra.mxu0 0.0
  %87 = vmatprep.subr.mxu0 0.0
  %88 = vmatpush1.msra.mxu0 0.0
  %89 = vmatprep.subr.mxu0 0.0
  %90 = vmatpush1.msra.mxu0 0.0
  %91 = vmatprep.subr.mxu0 0.0
  %92 = vmatpush1.msra.mxu0 0.0
  %93 = vmatprep.subr.mxu0 %v52
  %94 = vmatpush1.msra.mxu0 %v51
  %95 = vmatprep.subr.mxu0 %v50
  %96 = vmatpush1.msra.mxu0 %v49
  %97 = vmatprep.subr.mxu0 %v48
  %98 = vmatpush1.msra.mxu0 %v47
  %99 = vmatprep.subr.mxu0 %v46
  %100 = vmatpush1.msra.mxu0 %v45
  %101 = vmatprep.subr.mxu0 0.0
  %102 = vmatpush2.msra.mxu0 0.0
  %103 = vmatprep.subr.mxu0 0.0
  %104 = vmatpush2.msra.mxu0 0.0
  %105 = vmatprep.subr.mxu0 0.0
  %106 = vmatpush2.msra.mxu0 0.0
  %107 = vmatprep.subr.mxu0 0.0
  %108 = vmatpush2.msra.mxu0 0.0
  %109 = vmatprep.subr.mxu0 0.0
  %110 = vmatpush2.msra.mxu0 0.0
  %111 = vmatprep.subr.mxu0 0.0
  %112 = vmatpush2.msra.mxu0 0.0
  %113 = vmatprep.subr.mxu0 0.0
  %114 = vmatpush2.msra.mxu0 0.0
  %115 = vmatprep.subr.mxu0 0.0
  %116 = vmatpush2.msra.mxu0 0.0
  %117 = vmatprep.subr.mxu0 0.0
  %118 = vmatpush2.msra.mxu0 0.0
  %119 = vmatprep.subr.mxu0 0.0
  %120 = vmatpush2.msra.mxu0 0.0
  %121 = vmatprep.subr.mxu0 0.0
  %122 = vmatpush2.msra.mxu0 0.0
  %123 = vmatprep.subr.mxu0 0.0
  %124 = vmatpush2.msra.mxu0 0.0
  %125 = vmatprep.subr.mxu0 0.0
  %126 = vmatpush2.msra.mxu0 0.0
  %127 = vmatprep.subr.mxu0 0.0
  %128 = vmatpush2.msra.mxu0 0.0
  %129 = vmatprep.subr.mxu0 0.0
  %130 = vmatpush2.msra.mxu0 0.0
  %131 = vmatprep.subr.mxu0 0.0
  %132 = vmatpush2.msra.mxu0 0.0
  %133 = vmatprep.mubr.f32.mxu0 0.0
  %134 = vmatmul.mubr.f32.gmra.mxu0 %v67
  %v135 = vpop.f32.mrf.mxu0
  %v136 = vadd.f32 %v58, %v135
  %v137 = vpop.f32.mrf.mxu0
  %v138 = vadd.f32 %v62, %v137
  %139 = vdwg.mxu0
  %v140 = vld [vmem:[%s3] sm:$0xff]
  %v141 = vld [vmem:[%s3 + $0x8] sm:$0xff]
  %v142 = vld [vmem:[%s3 + $0x10] sm:$0xff]
  %v143 = vld [vmem:[%s3 + $0x18] sm:$0xff]
  %v144 = vld [vmem:[%s3 + $0x20] sm:$0xff]
  %v145 = vld [vmem:[%s3 + $0x28] sm:$0xff]
  %v146 = vld [vmem:[%s3 + $0x30] sm:$0xff]
  %v147 = vld [vmem:[%s3 + $0x38] sm:$0xff]
  %v148 = vld [vmem:[%s3 + $0x40] sm:$0xff]
  %v149 = vld [vmem:[%s3 + $0x48] sm:$0xff]
  %v150 = vld [vmem:[%s3 + $0x50] sm:$0xff]
  %v151 = vld [vmem:[%s3 + $0x58] sm:$0xff]
  %v152 = vld [vmem:[%s3 + $0x60] sm:$0xff]
  %v153 = vld [vmem:[%s3 + $0x68] sm:$0xff]
  %v154 = vld [vmem:[%s3 + $0x70] sm:$0xff]
  %v155 = vld [vmem:[%s3 + $0x78] sm:$0xff]
  %v156 = vld [vmem:[%s3 + $0x80] sm:$0xff]
  %v157 = vld [vmem:[%s3 + $0x88] sm:$0xff]
  %v158 = vld [vmem:[%s3 + $0x90] sm:$0xff]
  %v159 = vld [vmem:[%s3 + $0x98] sm:$0xff]
  %v160 = vld [vmem:[%s3 + $0xa0] sm:$0xff]
  %v161 = vld [vmem:[%s3 + $0xa8] sm:$0xff]
  %v162 = vld [vmem:[%s3 + $0xb0] sm:$0xff]
  %v163 = vld [vmem:[%s3 + $0xb8] sm:$0xff]
  %v164 = vld [vmem:[%s3 + $0xc0] sm:$0xff]
  %v165 = vld [vmem:[%s3 + $0xc8] sm:$0xff]
  %v166 = vld [vmem:[%s3 + $0xd0] sm:$0xff]
  %v167 = vld [vmem:[%s3 + $0xd8] sm:$0xff]
  %v168 = vld [vmem:[%s3 + $0xe0] sm:$0xff]
  %v169 = vld [vmem:[%s3 + $0xe8] sm:$0xff]
  %v170 = vld [vmem:[%s3 + $0xf0] sm:$0xff]
  %v171 = vld [vmem:[%s3 + $0xf8] sm:$0xff]
  %v172 = vld [vmem:[%s3 + $0x100] sm:$0xff]
  %v173 = vld [vmem:[%s3 + $0x108] sm:$0xff]
  %v174 = vld [vmem:[%s3 + $0x110] sm:$0xff]
  %v175 = vld [vmem:[%s3 + $0x118] sm:$0xff]
  %v176 = vld [vmem:[%s3 + $0x120] sm:$0xff]
  %v177 = vld [vmem:[%s3 + $0x128] sm:$0xff]
  %v178 = vld [vmem:[%s3 + $0x130] sm:$0xff]
  %v179 = vld [vmem:[%s3 + $0x138] sm:$0xff]
  %v180 = vld [vmem:[%s3 + $0x140] sm:$0xff]
  %v181 = vld [vmem:[%s3 + $0x148] sm:$0xff]
  %v182 = vld [vmem:[%s3 + $0x150] sm:$0xff]
  %v183 = vld [vmem:[%s3 + $0x158] sm:$0xff]
  %v184 = vld [vmem:[%s3 + $0x160] sm:$0xff]
  %v185 = vld [vmem:[%s3 + $0x168] sm:$0xff]
  %v186 = vld [vmem:[%s3 + $0x170] sm:$0xff]
  %v187 = vld [vmem:[%s3 + $0x178] sm:$0xff]
  %v188 = vld [vmem:[%s3 + $0x180] sm:$0xff]
  %v189 = vld [vmem:[%s3 + $0x188] sm:$0xff]
  %v190 = vld [vmem:[%s3 + $0x190] sm:$0xff]
  %v191 = vld [vmem:[%s3 + $0x198] sm:$0xff]
  %v192 = vld [vmem:[%s3 + $0x1a0] sm:$0xff]
  %v193 = vld [vmem:[%s3 + $0x1a8] sm:$0xff]
  %v194 = vld [vmem:[%s3 + $0x1b0] sm:$0xff]
  %v195 = vld [vmem:[%s3 + $0x1b8] sm:$0xff]
  %v196 = vld [vmem:[%s3 + $0x1c0] sm:$0xff]
  %v197 = vld [vmem:[%s3 + $0x1c8] sm:$0xff]
  %v198 = vld [vmem:[%s3 + $0x1d0] sm:$0xff]
  %v199 = vld [vmem:[%s3 + $0x1d8] sm:$0xff]
  %v200 = vld [vmem:[%s3 + $0x1e0] sm:$0xff]
  %v201 = vld [vmem:[%s3 + $0x1e8] sm:$0xff]
  %v202 = vld [vmem:[%s3 + $0x1f0] sm:$0xff]
  %v203 = vld [vmem:[%s3 + $0x1f8] sm:$0xff]
  %v204 = vld [vmem:[%s4] sm:$0x3]
  %v206 = vlaneseq
  %v207 = vshrl.u32 %v206, 7
  %v208 = vsub.s32 0, %v207
  %v209 = vrot.slane %v204, %v208
  %v210 = vlaneseq
  %v211 = vshrl.u32 %v210, 7
  %v212 = vsub.s32 1, %v211
  %v213 = vrot.slane %v204, %v212
  %216 = vmatprep.subr.mxu0 %v171
  %217 = vmatpush1.msra.mxu0 %v170
  %218 = vmatprep.subr.mxu0 %v169
  %219 = vmatpush1.msra.mxu0 %v168
  %220 = vmatprep.subr.mxu0 %v167
  %221 = vmatpush1.msra.mxu0 %v166
  %222 = vmatprep.subr.mxu0 %v165
  %223 = vmatpush1.msra.mxu0 %v164
  %224 = vmatprep.subr.mxu0 %v163
  %225 = vmatpush1.msra.mxu0 %v162
  %226 = vmatprep.subr.mxu0 %v161
  %227 = vmatpush1.msra.mxu0 %v160
  %228 = vmatprep.subr.mxu0 %v159
  %229 = vmatpush1.msra.mxu0 %v158
  %230 = vmatprep.subr.mxu0 %v157
  %231 = vmatpush1.msra.mxu0 %v156
  %232 = vmatprep.subr.mxu0 %v155
  %233 = vmatpush1.msra.mxu0 %v154
  %234 = vmatprep.subr.mxu0 %v153
  %235 = vmatpush1.msra.mxu0 %v152
  %236 = vmatprep.subr.mxu0 %v151
  %237 = vmatpush1.msra.mxu0 %v150
  %238 = vmatprep.subr.mxu0 %v149
  %239 = vmatpush1.msra.mxu0 %v148
  %240 = vmatprep.subr.mxu0 %v147
  %241 = vmatpush1.msra.mxu0 %v146
  %242 = vmatprep.subr.mxu0 %v145
  %243 = vmatpush1.msra.mxu0 %v144
  %244 = vmatprep.subr.mxu0 %v143
  %245 = vmatpush1.msra.mxu0 %v142
  %246 = vmatprep.subr.mxu0 %v141
  %247 = vmatpush1.msra.mxu0 %v140
  %248 = vmatprep.subr.mxu0 %v203
  %249 = vmatpush2.msra.mxu0 %v202
  %250 = vmatprep.subr.mxu0 %v201
  %251 = vmatpush2.msra.mxu0 %v200
  %252 = vmatprep.subr.mxu0 %v199
  %253 = vmatpush2.msra.mxu0 %v198
  %254 = vmatprep.subr.mxu0 %v197
  %255 = vmatpush2.msra.mxu0 %v196
  %256 = vmatprep.subr.mxu0 %v195
  %257 = vmatpush2.msra.mxu0 %v194
  %258 = vmatprep.subr.mxu0 %v193
  %259 = vmatpush2.msra.mxu0 %v192
  %260 = vmatprep.subr.mxu0 %v191
  %261 = vmatpush2.msra.mxu0 %v190
  %262 = vmatprep.subr.mxu0 %v189
  %263 = vmatpush2.msra.mxu0 %v188
  %264 = vmatprep.subr.mxu0 %v187
  %265 = vmatpush2.msra.mxu0 %v186
  %266 = vmatprep.subr.mxu0 %v185
  %267 = vmatpush2.msra.mxu0 %v184
  %268 = vmatprep.subr.mxu0 %v183
  %269 = vmatpush2.msra.mxu0 %v182
  %270 = vmatprep.subr.mxu0 %v181
  %271 = vmatpush2.msra.mxu0 %v180
  %272 = vmatprep.subr.mxu0 %v179
  %273 = vmatpush2.msra.mxu0 %v178
  %274 = vmatprep.subr.mxu0 %v177
  %275 = vmatpush2.msra.mxu0 %v176
  %276 = vmatprep.subr.mxu0 %v175
  %277 = vmatpush2.msra.mxu0 %v174
  %278 = vmatprep.subr.mxu0 %v173
  %279 = vmatpush2.msra.mxu0 %v172
  %280 = vmatprep.mubr.f32.mxu0 %v138
  %281 = vmatmul.mubr.f32.gmra.mxu0 %v136
  %v282 = vpop.f32.mrf.mxu0
  %v283 = vadd.f32 %v209, %v282
  %v284 = vpop.f32.mrf.mxu0
  %v285 = vadd.f32 %v213, %v284
  %286 = vdwg.mxu0
  %v287 = vadd.f32 %v136, %v283
  %v288 = vadd.f32 %v138, %v285
  %v289 = vadd.f32 %v287, %v288
  %290 = vadd.xlane.f32.xlu0 %v289
  %v291 = vpop.xlane.xlu0 %290
  %v292 = vrcp.pop 256.0
  %v293 = vmul.f32 %v291, %v292
  %v294 = vsub.f32 %v287, %v293
  %v295 = vsub.f32 %v288, %v293
  %v296 = vmul.f32 %v294, %v294
  %v297 = vmul.f32 %v295, %v295
  %v298 = vadd.f32 %v296, %v297
  %299 = vadd.xlane.f32.xlu0 %v298
  %v300 = vpop.xlane.xlu0 %299
  %v301 = vmul.f32 %v300, %v292
  %v302 = vadd.f32 %v301, 1e-05
  %v303 = vrsqrt.pop %v302
  %v304 = vmul.f32 %v294, %v303
  %v305 = vmul.f32 %v295, %v303
  %v306 = vld [vmem:[%s5] sm:$0x3]
  %v308 = vlaneseq
  %v309 = vshrl.u32 %v308, 7
  %v310 = vsub.s32 0, %v309
  %v311 = vrot.slane %v306, %v310
  %v312 = vlaneseq
  %v313 = vshrl.u32 %v312, 7
  %v314 = vsub.s32 1, %v313
  %v315 = vrot.slane %v306, %v314
  %v318 = vmul.f32 %v304, %v311
  %v319 = vmul.f32 %v305, %v315
  %v320 = vld [vmem:[%s6] sm:$0x3]
  %v322 = vlaneseq
  %v323 = vshrl.u32 %v322, 7
  %v324 = vsub.s32 0, %v323
  %v325 = vrot.slane %v320, %v324
  %v326 = vlaneseq
  %v327 = vshrl.u32 %v326, 7
  %v328 = vsub.s32 1, %v327
  %v329 = vrot.slane %v320, %v328
  %v332 = vadd.f32 %v318, %v325
  %v333 = vadd.f32 %v319, %v329
  %v334 = vld [vmem:[%s7] sm:$0xff]
  %v335 = vld [vmem:[%s7 + $0x8] sm:$0xff]
  %v336 = vld [vmem:[%s7 + $0x10] sm:$0xff]
  %v337 = vld [vmem:[%s7 + $0x18] sm:$0xff]
  %v338 = vld [vmem:[%s7 + $0x20] sm:$0xff]
  %v339 = vld [vmem:[%s7 + $0x28] sm:$0xff]
  %v340 = vld [vmem:[%s7 + $0x30] sm:$0xff]
  %v341 = vld [vmem:[%s7 + $0x38] sm:$0xff]
  %v342 = vld [vmem:[%s7 + $0x40] sm:$0xff]
  %v343 = vld [vmem:[%s7 + $0x48] sm:$0xff]
  %v344 = vld [vmem:[%s7 + $0x50] sm:$0xff]
  %v345 = vld [vmem:[%s7 + $0x58] sm:$0xff]
  %v346 = vld [vmem:[%s7 + $0x60] sm:$0xff]
  %v347 = vld [vmem:[%s7 + $0x68] sm:$0xff]
  %v348 = vld [vmem:[%s7 + $0x70] sm:$0xff]
  %v349 = vld [vmem:[%s7 + $0x78] sm:$0xff]
  %v350 = vld [vmem:[%s7 + $0x80] sm:$0xff]
  %v351 = vld [vmem:[%s7 + $0x88] sm:$0xff]
  %v352 = vld [vmem:[%s7 + $0x90] sm:$0xff]
  %v353 = vld [vmem:[%s7 + $0x98] sm:$0xff]
  %v354 = vld [vmem:[%s7 + $0xa0] sm:$0xff]
  %v355 = vld [vmem:[%s7 + $0xa8] sm:$0xff]
  %v356 = vld [vmem:[%s7 + $0xb0] sm:$0xff]
  %v357 = vld [vmem:[%s7 + $0xb8] sm:$0xff]
  %v358 = vld [vmem:[%s7 + $0xc0] sm:$0xff]
  %v359 = vld [vmem:[%s7 + $0xc8] sm:$0xff]
  %v360 = vld [vmem:[%s7 + $0xd0] sm:$0xff]
  %v361 = vld [vmem:[%s7 + $0xd8] sm:$0xff]
  %v362 = vld [vmem:[%s7 + $0xe0] sm:$0xff]
  %v363 = vld [vmem:[%s7 + $0xe8] sm:$0xff]
  %v364 = vld [vmem:[%s7 + $0xf0] sm:$0xff]
  %v365 = vld [vmem:[%s7 + $0xf8] sm:$0xff]
  %v366 = vld [vmem:[%s7 + $0x100] sm:$0xff]
  %v367 = vld [vmem:[%s7 + $0x108] sm:$0xff]
  %v368 = vld [vmem:[%s7 + $0x110] sm:$0xff]
  %v369 = vld [vmem:[%s7 + $0x118] sm:$0xff]
  %v370 = vld [vmem:[%s7 + $0x120] sm:$0xff]
  %v371 = vld [vmem:[%s7 + $0x128] sm:$0xff]
  %v372 = vld [vmem:[%s7 + $0x130] sm:$0xff]
  %v373 = vld [vmem:[%s7 + $0x138] sm:$0xff]
  %v374 = vld [vmem:[%s7 + $0x140] sm:$0xff]
  %v375 = vld [vmem:[%s7 + $0x148] sm:$0xff]
  %v376 = vld [vmem:[%s7 + $0x150] sm:$0xff]
  %v377 = vld [vmem:[%s7 + $0x158] sm:$0xff]
  %v378 = vld [vmem:[%s7 + $0x160] sm:$0xff]
  %v379 = vld [vmem:[%s7 + $0x168] sm:$0xff]
  %v380 = vld [vmem:[%s7 + $0x170] sm:$0xff]
  %v381 = vld [vmem:[%s7 + $0x178] sm:$0xff]
  %v382 = vld [vmem:[%s7 + $0x180] sm:$0xff]
  %v383 = vld [vmem:[%s7 + $0x188] sm:$0xff]
  %v384 = vld [vmem:[%s7 + $0x190] sm:$0xff]
  %v385 = vld [vmem:[%s7 + $0x198] sm:$0xff]
  %v386 = vld [vmem:[%s7 + $0x1a0] sm:$0xff]
  %v387 = vld [vmem:[%s7 + $0x1a8] sm:$0xff]
  %v388 = vld [vmem:[%s7 + $0x1b0] sm:$0xff]
  %v389 = vld [vmem:[%s7 + $0x1b8] sm:$0xff]
  %v390 = vld [vmem:[%s7 + $0x1c0] sm:$0xff]
  %v391 = vld [vmem:[%s7 + $0x1c8] sm:$0xff]
  %v392 = vld [vmem:[%s7 + $0x1d0] sm:$0xff]
  %v393 = vld [vmem:[%s7 + $0x1d8] sm:$0xff]
  %v394 = vld [vmem:[%s7 + $0x1e0] sm:$0xff]
  %v395 = vld [vmem:[%s7 + $0x1e8] sm:$0xff]
  %v396 = vld [vmem:[%s7 + $0x1f0] sm:$0xff]
  %v397 = vld [vmem:[%s7 + $0x1f8] sm:$0xff]
  %v398 = vld [vmem:[%s7 + $0x200] sm:$0xff]
  %v399 = vld [vmem:[%s7 + $0x208] sm:$0xff]
  %v400 = vld [vmem:[%s7 + $0x210] sm:$0xff]
  %v401 = vld [vmem:[%s7 + $0x218] sm:$0xff]
  %v402 = vld [vmem:[%s7 + $0x220] sm:$0xff]
  %v403 = vld [vmem:[%s7 + $0x228] sm:$0xff]
  %v404 = vld [vmem:[%s7 + $0x230] sm:$0xff]
  %v405 = vld [vmem:[%s7 + $0x238] sm:$0xff]
  %v406 = vld [vmem:[%s7 + $0x240] sm:$0xff]
  %v407 = vld [vmem:[%s7 + $0x248] sm:$0xff]
  %v408 = vld [vmem:[%s7 + $0x250] sm:$0xff]
  %v409 = vld [vmem:[%s7 + $0x258] sm:$0xff]
  %v410 = vld [vmem:[%s7 + $0x260] sm:$0xff]
  %v411 = vld [vmem:[%s7 + $0x268] sm:$0xff]
  %v412 = vld [vmem:[%s7 + $0x270] sm:$0xff]
  %v413 = vld [vmem:[%s7 + $0x278] sm:$0xff]
  %v414 = vld [vmem:[%s7 + $0x280] sm:$0xff]
  %v415 = vld [vmem:[%s7 + $0x288] sm:$0xff]
  %v416 = vld [vmem:[%s7 + $0x290] sm:$0xff]
  %v417 = vld [vmem:[%s7 + $0x298] sm:$0xff]
  %v418 = vld [vmem:[%s7 + $0x2a0] sm:$0xff]
  %v419 = vld [vmem:[%s7 + $0x2a8] sm:$0xff]
  %v420 = vld [vmem:[%s7 + $0x2b0] sm:$0xff]
  %v421 = vld [vmem:[%s7 + $0x2b8] sm:$0xff]
  %v422 = vld [vmem:[%s7 + $0x2c0] sm:$0xff]
  %v423 = vld [vmem:[%s7 + $0x2c8] sm:$0xff]
  %v424 = vld [vmem:[%s7 + $0x2d0] sm:$0xff]
  %v425 = vld [vmem:[%s7 + $0x2d8] sm:$0xff]
  %v426 = vld [vmem:[%s7 + $0x2e0] sm:$0xff]
  %v427 = vld [vmem:[%s7 + $0x2e8] sm:$0xff]
  %v428 = vld [vmem:[%s7 + $0x2f0] sm:$0xff]
  %v429 = vld [vmem:[%s7 + $0x2f8] sm:$0xff]
  %v430 = vld [vmem:[%s7 + $0x300] sm:$0xff]
  %v431 = vld [vmem:[%s7 + $0x308] sm:$0xff]
  %v432 = vld [vmem:[%s7 + $0x310] sm:$0xff]
  %v433 = vld [vmem:[%s7 + $0x318] sm:$0xff]
  %v434 = vld [vmem:[%s7 + $0x320] sm:$0xff]
  %v435 = vld [vmem:[%s7 + $0x328] sm:$0xff]
  %v436 = vld [vmem:[%s7 + $0x330] sm:$0xff]
  %v437 = vld [vmem:[%s7 + $0x338] sm:$0xff]
  %v438 = vld [vmem:[%s7 + $0x340] sm:$0xff]
  %v439 = vld [vmem:[%s7 + $0x348] sm:$0xff]
  %v440 = vld [vmem:[%s7 + $0x350] sm:$0xff]
  %v441 = vld [vmem:[%s7 + $0x358] sm:$0xff]
  %v442 = vld [vmem:[%s7 + $0x360] sm:$0xff]
  %v443 = vld [vmem:[%s7 + $0x368] sm:$0xff]
  %v444 = vld [vmem:[%s7 + $0x370] sm:$0xff]
  %v445 = vld [vmem:[%s7 + $0x378] sm:$0xff]
  %v446 = vld [vmem:[%s7 + $0x380] sm:$0xff]
  %v447 = vld [vmem:[%s7 + $0x388] sm:$0xff]
  %v448 = vld [vmem:[%s7 + $0x390] sm:$0xff]
  %v449 = vld [vmem:[%s7 + $0x398] sm:$0xff]
  %v450 = vld [vmem:[%s7 + $0x3a0] sm:$0xff]
  %v451 = vld [vmem:[%s7 + $0x3a8] sm:$0xff]
  %v452 = vld [vmem:[%s7 + $0x3b0] sm:$0xff]
  %v453 = vld [vmem:[%s7 + $0x3b8] sm:$0xff]
  %v454 = vld [vmem:[%s7 + $0x3c0] sm:$0xff]
  %v455 = vld [vmem:[%s7 + $0x3c8] sm:$0xff]
  %v456 = vld [vmem:[%s7 + $0x3d0] sm:$0xff]
  %v457 = vld [vmem:[%s7 + $0x3d8] sm:$0xff]
  %v458 = vld [vmem:[%s7 + $0x3e0] sm:$0xff]
  %v459 = vld [vmem:[%s7 + $0x3e8] sm:$0xff]
  %v460 = vld [vmem:[%s7 + $0x3f0] sm:$0xff]
  %v461 = vld [vmem:[%s7 + $0x3f8] sm:$0xff]
  %v462 = vld [vmem:[%s7 + $0x400] sm:$0xff]
  %v463 = vld [vmem:[%s7 + $0x408] sm:$0xff]
  %v464 = vld [vmem:[%s7 + $0x410] sm:$0xff]
  %v465 = vld [vmem:[%s7 + $0x418] sm:$0xff]
  %v466 = vld [vmem:[%s7 + $0x420] sm:$0xff]
  %v467 = vld [vmem:[%s7 + $0x428] sm:$0xff]
  %v468 = vld [vmem:[%s7 + $0x430] sm:$0xff]
  %v469 = vld [vmem:[%s7 + $0x438] sm:$0xff]
  %v470 = vld [vmem:[%s7 + $0x440] sm:$0xff]
  %v471 = vld [vmem:[%s7 + $0x448] sm:$0xff]
  %v472 = vld [vmem:[%s7 + $0x450] sm:$0xff]
  %v473 = vld [vmem:[%s7 + $0x458] sm:$0xff]
  %v474 = vld [vmem:[%s7 + $0x460] sm:$0xff]
  %v475 = vld [vmem:[%s7 + $0x468] sm:$0xff]
  %v476 = vld [vmem:[%s7 + $0x470] sm:$0xff]
  %v477 = vld [vmem:[%s7 + $0x478] sm:$0xff]
  %v478 = vld [vmem:[%s7 + $0x480] sm:$0xff]
  %v479 = vld [vmem:[%s7 + $0x488] sm:$0xff]
  %v480 = vld [vmem:[%s7 + $0x490] sm:$0xff]
  %v481 = vld [vmem:[%s7 + $0x498] sm:$0xff]
  %v482 = vld [vmem:[%s7 + $0x4a0] sm:$0xff]
  %v483 = vld [vmem:[%s7 + $0x4a8] sm:$0xff]
  %v484 = vld [vmem:[%s7 + $0x4b0] sm:$0xff]
  %v485 = vld [vmem:[%s7 + $0x4b8] sm:$0xff]
  %v486 = vld [vmem:[%s7 + $0x4c0] sm:$0xff]
  %v487 = vld [vmem:[%s7 + $0x4c8] sm:$0xff]
  %v488 = vld [vmem:[%s7 + $0x4d0] sm:$0xff]
  %v489 = vld [vmem:[%s7 + $0x4d8] sm:$0xff]
  %v490 = vld [vmem:[%s7 + $0x4e0] sm:$0xff]
  %v491 = vld [vmem:[%s7 + $0x4e8] sm:$0xff]
  %v492 = vld [vmem:[%s7 + $0x4f0] sm:$0xff]
  %v493 = vld [vmem:[%s7 + $0x4f8] sm:$0xff]
  %v494 = vld [vmem:[%s7 + $0x500] sm:$0xff]
  %v495 = vld [vmem:[%s7 + $0x508] sm:$0xff]
  %v496 = vld [vmem:[%s7 + $0x510] sm:$0xff]
  %v497 = vld [vmem:[%s7 + $0x518] sm:$0xff]
  %v498 = vld [vmem:[%s7 + $0x520] sm:$0xff]
  %v499 = vld [vmem:[%s7 + $0x528] sm:$0xff]
  %v500 = vld [vmem:[%s7 + $0x530] sm:$0xff]
  %v501 = vld [vmem:[%s7 + $0x538] sm:$0xff]
  %v502 = vld [vmem:[%s7 + $0x540] sm:$0xff]
  %v503 = vld [vmem:[%s7 + $0x548] sm:$0xff]
  %v504 = vld [vmem:[%s7 + $0x550] sm:$0xff]
  %v505 = vld [vmem:[%s7 + $0x558] sm:$0xff]
  %v506 = vld [vmem:[%s7 + $0x560] sm:$0xff]
  %v507 = vld [vmem:[%s7 + $0x568] sm:$0xff]
  %v508 = vld [vmem:[%s7 + $0x570] sm:$0xff]
  %v509 = vld [vmem:[%s7 + $0x578] sm:$0xff]
  %v510 = vld [vmem:[%s7 + $0x580] sm:$0xff]
  %v511 = vld [vmem:[%s7 + $0x588] sm:$0xff]
  %v512 = vld [vmem:[%s7 + $0x590] sm:$0xff]
  %v513 = vld [vmem:[%s7 + $0x598] sm:$0xff]
  %v514 = vld [vmem:[%s7 + $0x5a0] sm:$0xff]
  %v515 = vld [vmem:[%s7 + $0x5a8] sm:$0xff]
  %v516 = vld [vmem:[%s7 + $0x5b0] sm:$0xff]
  %v517 = vld [vmem:[%s7 + $0x5b8] sm:$0xff]
  %v518 = vld [vmem:[%s7 + $0x5c0] sm:$0xff]
  %v519 = vld [vmem:[%s7 + $0x5c8] sm:$0xff]
  %v520 = vld [vmem:[%s7 + $0x5d0] sm:$0xff]
  %v521 = vld [vmem:[%s7 + $0x5d8] sm:$0xff]
  %v522 = vld [vmem:[%s7 + $0x5e0] sm:$0xff]
  %v523 = vld [vmem:[%s7 + $0x5e8] sm:$0xff]
  %v524 = vld [vmem:[%s7 + $0x5f0] sm:$0xff]
  %v525 = vld [vmem:[%s7 + $0x5f8] sm:$0xff]
  %v526 = vld [vmem:[%s7 + $0x600] sm:$0xff]
  %v527 = vld [vmem:[%s7 + $0x608] sm:$0xff]
  %v528 = vld [vmem:[%s7 + $0x610] sm:$0xff]
  %v529 = vld [vmem:[%s7 + $0x618] sm:$0xff]
  %v530 = vld [vmem:[%s7 + $0x620] sm:$0xff]
  %v531 = vld [vmem:[%s7 + $0x628] sm:$0xff]
  %v532 = vld [vmem:[%s7 + $0x630] sm:$0xff]
  %v533 = vld [vmem:[%s7 + $0x638] sm:$0xff]
  %v534 = vld [vmem:[%s7 + $0x640] sm:$0xff]
  %v535 = vld [vmem:[%s7 + $0x648] sm:$0xff]
  %v536 = vld [vmem:[%s7 + $0x650] sm:$0xff]
  %v537 = vld [vmem:[%s7 + $0x658] sm:$0xff]
  %v538 = vld [vmem:[%s7 + $0x660] sm:$0xff]
  %v539 = vld [vmem:[%s7 + $0x668] sm:$0xff]
  %v540 = vld [vmem:[%s7 + $0x670] sm:$0xff]
  %v541 = vld [vmem:[%s7 + $0x678] sm:$0xff]
  %v542 = vld [vmem:[%s7 + $0x680] sm:$0xff]
  %v543 = vld [vmem:[%s7 + $0x688] sm:$0xff]
  %v544 = vld [vmem:[%s7 + $0x690] sm:$0xff]
  %v545 = vld [vmem:[%s7 + $0x698] sm:$0xff]
  %v546 = vld [vmem:[%s7 + $0x6a0] sm:$0xff]
  %v547 = vld [vmem:[%s7 + $0x6a8] sm:$0xff]
  %v548 = vld [vmem:[%s7 + $0x6b0] sm:$0xff]
  %v549 = vld [vmem:[%s7 + $0x6b8] sm:$0xff]
  %v550 = vld [vmem:[%s7 + $0x6c0] sm:$0xff]
  %v551 = vld [vmem:[%s7 + $0x6c8] sm:$0xff]
  %v552 = vld [vmem:[%s7 + $0x6d0] sm:$0xff]
  %v553 = vld [vmem:[%s7 + $0x6d8] sm:$0xff]
  %v554 = vld [vmem:[%s7 + $0x6e0] sm:$0xff]
  %v555 = vld [vmem:[%s7 + $0x6e8] sm:$0xff]
  %v556 = vld [vmem:[%s7 + $0x6f0] sm:$0xff]
  %v557 = vld [vmem:[%s7 + $0x6f8] sm:$0xff]
  %v558 = vld [vmem:[%s7 + $0x700] sm:$0xff]
  %v559 = vld [vmem:[%s7 + $0x708] sm:$0xff]
  %v560 = vld [vmem:[%s7 + $0x710] sm:$0xff]
  %v561 = vld [vmem:[%s7 + $0x718] sm:$0xff]
  %v562 = vld [vmem:[%s7 + $0x720] sm:$0xff]
  %v563 = vld [vmem:[%s7 + $0x728] sm:$0xff]
  %v564 = vld [vmem:[%s7 + $0x730] sm:$0xff]
  %v565 = vld [vmem:[%s7 + $0x738] sm:$0xff]
  %v566 = vld [vmem:[%s7 + $0x740] sm:$0xff]
  %v567 = vld [vmem:[%s7 + $0x748] sm:$0xff]
  %v568 = vld [vmem:[%s7 + $0x750] sm:$0xff]
  %v569 = vld [vmem:[%s7 + $0x758] sm:$0xff]
  %v570 = vld [vmem:[%s7 + $0x760] sm:$0xff]
  %v571 = vld [vmem:[%s7 + $0x768] sm:$0xff]
  %v572 = vld [vmem:[%s7 + $0x770] sm:$0xff]
  %v573 = vld [vmem:[%s7 + $0x778] sm:$0xff]
  %v574 = vld [vmem:[%s7 + $0x780] sm:$0xff]
  %v575 = vld [vmem:[%s7 + $0x788] sm:$0xff]
  %v576 = vld [vmem:[%s7 + $0x790] sm:$0xff]
  %v577 = vld [vmem:[%s7 + $0x798] sm:$0xff]
  %v578 = vld [vmem:[%s7 + $0x7a0] sm:$0xff]
  %v579 = vld [vmem:[%s7 + $0x7a8] sm:$0xff]
  %v580 = vld [vmem:[%s7 + $0x7b0] sm:$0xff]
  %v581 = vld [vmem:[%s7 + $0x7b8] sm:$0xff]
  %v582 = vld [vmem:[%s7 + $0x7c0] sm:$0xff]
  %v583 = vld [vmem:[%s7 + $0x7c8] sm:$0xff]
  %v584 = vld [vmem:[%s7 + $0x7d0] sm:$0xff]
  %v585 = vld [vmem:[%s7 + $0x7d8] sm:$0xff]
  %v586 = vld [vmem:[%s7 + $0x7e0] sm:$0xff]
  %v587 = vld [vmem:[%s7 + $0x7e8] sm:$0xff]
  %v588 = vld [vmem:[%s7 + $0x7f0] sm:$0xff]
  %v589 = vld [vmem:[%s7 + $0x7f8] sm:$0xff]
  %v590 = vld [vmem:[%s8] sm:$0xff]
  %v592 = vlaneseq
  %v593 = vshrl.u32 %v592, 7
  %v594 = vsub.s32 0, %v593
  %v595 = vrot.slane %v590, %v594
  %v596 = vlaneseq
  %v597 = vshrl.u32 %v596, 7
  %v598 = vsub.s32 1, %v597
  %v599 = vrot.slane %v590, %v598
  %v600 = vlaneseq
  %v601 = vshrl.u32 %v600, 7
  %v602 = vsub.s32 2, %v601
  %v603 = vrot.slane %v590, %v602
  %v604 = vlaneseq
  %v605 = vshrl.u32 %v604, 7
  %v606 = vsub.s32 3, %v605
  %v607 = vrot.slane %v590, %v606
  %v608 = vlaneseq
  %v609 = vshrl.u32 %v608, 7
  %v610 = vsub.s32 4, %v609
  %v611 = vrot.slane %v590, %v610
  %v612 = vlaneseq
  %v613 = vshrl.u32 %v612, 7
  %v614 = vsub.s32 5, %v613
  %v615 = vrot.slane %v590, %v614
  %v616 = vlaneseq
  %v617 = vshrl.u32 %v616, 7
  %v618 = vsub.s32 6, %v617
  %v619 = vrot.slane %v590, %v618
  %v620 = vlaneseq
  %v621 = vshrl.u32 %v620, 7
  %v622 = vsub.s32 7, %v621
  %v623 = vrot.slane %v590, %v622
  %632 = vmatprep.subr.mxu0 %v455
  %633 = vmatpush1.msra.mxu0 %v454
  %634 = vmatprep.subr.mxu0 %v447
  %635 = vmatpush1.msra.mxu0 %v446
  %636 = vmatprep.subr.mxu0 %v439
  %637 = vmatpush1.msra.mxu0 %v438
  %638 = vmatprep.subr.mxu0 %v431
  %639 = vmatpush1.msra.mxu0 %v430
  %640 = vmatprep.subr.mxu0 %v423
  %641 = vmatpush1.msra.mxu0 %v422
  %642 = vmatprep.subr.mxu0 %v415
  %643 = vmatpush1.msra.mxu0 %v414
  %644 = vmatprep.subr.mxu0 %v407
  %645 = vmatpush1.msra.mxu0 %v406
  %646 = vmatprep.subr.mxu0 %v399
  %647 = vmatpush1.msra.mxu0 %v398
  %648 = vmatprep.subr.mxu0 %v391
  %649 = vmatpush1.msra.mxu0 %v390
  %650 = vmatprep.subr.mxu0 %v383
  %651 = vmatpush1.msra.mxu0 %v382
  %652 = vmatprep.subr.mxu0 %v375
  %653 = vmatpush1.msra.mxu0 %v374
  %654 = vmatprep.subr.mxu0 %v367
  %655 = vmatpush1.msra.mxu0 %v366
  %656 = vmatprep.subr.mxu0 %v359
  %657 = vmatpush1.msra.mxu0 %v358
  %658 = vmatprep.subr.mxu0 %v351
  %659 = vmatpush1.msra.mxu0 %v350
  %660 = vmatprep.subr.mxu0 %v343
  %661 = vmatpush1.msra.mxu0 %v342
  %662 = vmatprep.subr.mxu0 %v335
  %663 = vmatpush1.msra.mxu0 %v334
  %664 = vmatprep.subr.mxu0 %v583
  %665 = vmatpush2.msra.mxu0 %v582
  %666 = vmatprep.subr.mxu0 %v575
  %667 = vmatpush2.msra.mxu0 %v574
  %668 = vmatprep.subr.mxu0 %v567
  %669 = vmatpush2.msra.mxu0 %v566
  %670 = vmatprep.subr.mxu0 %v559
  %671 = vmatpush2.msra.mxu0 %v558
  %672 = vmatprep.subr.mxu0 %v551
  %673 = vmatpush2.msra.mxu0 %v550
  %674 = vmatprep.subr.mxu0 %v543
  %675 = vmatpush2.msra.mxu0 %v542
  %676 = vmatprep.subr.mxu0 %v535
  %677 = vmatpush2.msra.mxu0 %v534
  %678 = vmatprep.subr.mxu0 %v527
  %679 = vmatpush2.msra.mxu0 %v526
  %680 = vmatprep.subr.mxu0 %v519
  %681 = vmatpush2.msra.mxu0 %v518
  %682 = vmatprep.subr.mxu0 %v511
  %683 = vmatpush2.msra.mxu0 %v510
  %684 = vmatprep.subr.mxu0 %v503
  %685 = vmatpush2.msra.mxu0 %v502
  %686 = vmatprep.subr.mxu0 %v495
  %687 = vmatpush2.msra.mxu0 %v494
  %688 = vmatprep.subr.mxu0 %v487
  %689 = vmatpush2.msra.mxu0 %v486
  %690 = vmatprep.subr.mxu0 %v479
  %691 = vmatpush2.msra.mxu0 %v478
  %692 = vmatprep.subr.mxu0 %v471
  %693 = vmatpush2.msra.mxu0 %v470
  %694 = vmatprep.subr.mxu0 %v463
  %695 = vmatpush2.msra.mxu0 %v462
  %696 = vmatprep.mubr.f32.mxu0 %v333
  %697 = vmatmul.mubr.f32.gmra.mxu0 %v332
  %v698 = vpop.f32.mrf.mxu0
  %v699 = vadd.f32 %v595, %v698
  %v700 = vpop.f32.mrf.mxu0
  %v701 = vadd.f32 %v599, %v700
  %702 = vdwg.mxu0
  %703 = vmatprep.subr.mxu0 %v457
  %704 = vmatpush1.msra.mxu0 %v456
  %705 = vmatprep.subr.mxu0 %v449
  %706 = vmatpush1.msra.mxu0 %v448
  %707 = vmatprep.subr.mxu0 %v441
  %708 = vmatpush1.msra.mxu0 %v440
  %709 = vmatprep.subr.mxu0 %v433
  %710 = vmatpush1.msra.mxu0 %v432
  %711 = vmatprep.subr.mxu0 %v425
  %712 = vmatpush1.msra.mxu0 %v424
  %713 = vmatprep.subr.mxu0 %v417
  %714 = vmatpush1.msra.mxu0 %v416
  %715 = vmatprep.subr.mxu0 %v409
  %716 = vmatpush1.msra.mxu0 %v408
  %717 = vmatprep.subr.mxu0 %v401
  %718 = vmatpush1.msra.mxu0 %v400
  %719 = vmatprep.subr.mxu0 %v393
  %720 = vmatpush1.msra.mxu0 %v392
  %721 = vmatprep.subr.mxu0 %v385
  %722 = vmatpush1.msra.mxu0 %v384
  %723 = vmatprep.subr.mxu0 %v377
  %724 = vmatpush1.msra.mxu0 %v376
  %725 = vmatprep.subr.mxu0 %v369
  %726 = vmatpush1.msra.mxu0 %v368
  %727 = vmatprep.subr.mxu0 %v361
  %728 = vmatpush1.msra.mxu0 %v360
  %729 = vmatprep.subr.mxu0 %v353
  %730 = vmatpush1.msra.mxu0 %v352
  %731 = vmatprep.subr.mxu0 %v345
  %732 = vmatpush1.msra.mxu0 %v344
  %733 = vmatprep.subr.mxu0 %v337
  %734 = vmatpush1.msra.mxu0 %v336
  %735 = vmatprep.subr.mxu0 %v585
  %736 = vmatpush2.msra.mxu0 %v584
  %737 = vmatprep.subr.mxu0 %v577
  %738 = vmatpush2.msra.mxu0 %v576
  %739 = vmatprep.subr.mxu0 %v569
  %740 = vmatpush2.msra.mxu0 %v568
  %741 = vmatprep.subr.mxu0 %v561
  %742 = vmatpush2.msra.mxu0 %v560
  %743 = vmatprep.subr.mxu0 %v553
  %744 = vmatpush2.msra.mxu0 %v552
  %745 = vmatprep.subr.mxu0 %v545
  %746 = vmatpush2.msra.mxu0 %v544
  %747 = vmatprep.subr.mxu0 %v537
  %748 = vmatpush2.msra.mxu0 %v536
  %749 = vmatprep.subr.mxu0 %v529
  %750 = vmatpush2.msra.mxu0 %v528
  %751 = vmatprep.subr.mxu0 %v521
  %752 = vmatpush2.msra.mxu0 %v520
  %753 = vmatprep.subr.mxu0 %v513
  %754 = vmatpush2.msra.mxu0 %v512
  %755 = vmatprep.subr.mxu0 %v505
  %756 = vmatpush2.msra.mxu0 %v504
  %757 = vmatprep.subr.mxu0 %v497
  %758 = vmatpush2.msra.mxu0 %v496
  %759 = vmatprep.subr.mxu0 %v489
  %760 = vmatpush2.msra.mxu0 %v488
  %761 = vmatprep.subr.mxu0 %v481
  %762 = vmatpush2.msra.mxu0 %v480
  %763 = vmatprep.subr.mxu0 %v473
  %764 = vmatpush2.msra.mxu0 %v472
  %765 = vmatprep.subr.mxu0 %v465
  %766 = vmatpush2.msra.mxu0 %v464
  %767 = vmatprep.mubr.f32.mxu0 %v333
  %768 = vmatmul.mubr.f32.gmra.mxu0 %v332
  %v769 = vpop.f32.mrf.mxu0
  %v770 = vadd.f32 %v603, %v769
  %v771 = vpop.f32.mrf.mxu0
  %v772 = vadd.f32 %v607, %v771
  %773 = vdwg.mxu0
  %774 = vmatprep.subr.mxu0 %v459
  %775 = vmatpush1.msra.mxu0 %v458
  %776 = vmatprep.subr.mxu0 %v451
  %777 = vmatpush1.msra.mxu0 %v450
  %778 = vmatprep.subr.mxu0 %v443
  %779 = vmatpush1.msra.mxu0 %v442
  %780 = vmatprep.subr.mxu0 %v435
  %781 = vmatpush1.msra.mxu0 %v434
  %782 = vmatprep.subr.mxu0 %v427
  %783 = vmatpush1.msra.mxu0 %v426
  %784 = vmatprep.subr.mxu0 %v419
  %785 = vmatpush1.msra.mxu0 %v418
  %786 = vmatprep.subr.mxu0 %v411
  %787 = vmatpush1.msra.mxu0 %v410
  %788 = vmatprep.subr.mxu0 %v403
  %789 = vmatpush1.msra.mxu0 %v402
  %790 = vmatprep.subr.mxu0 %v395
  %791 = vmatpush1.msra.mxu0 %v394
  %792 = vmatprep.subr.mxu0 %v387
  %793 = vmatpush1.msra.mxu0 %v386
  %794 = vmatprep.subr.mxu0 %v379
  %795 = vmatpush1.msra.mxu0 %v378
  %796 = vmatprep.subr.mxu0 %v371
  %797 = vmatpush1.msra.mxu0 %v370
  %798 = vmatprep.subr.mxu0 %v363
  %799 = vmatpush1.msra.mxu0 %v362
  %800 = vmatprep.subr.mxu0 %v355
  %801 = vmatpush1.msra.mxu0 %v354
  %802 = vmatprep.subr.mxu0 %v347
  %803 = vmatpush1.msra.mxu0 %v346
  %804 = vmatprep.subr.mxu0 %v339
  %805 = vmatpush1.msra.mxu0 %v338
  %806 = vmatprep.subr.mxu0 %v587
  %807 = vmatpush2.msra.mxu0 %v586
  %808 = vmatprep.subr.mxu0 %v579
  %809 = vmatpush2.msra.mxu0 %v578
  %810 = vmatprep.subr.mxu0 %v571
  %811 = vmatpush2.msra.mxu0 %v570
  %812 = vmatprep.subr.mxu0 %v563
  %813 = vmatpush2.msra.mxu0 %v562
  %814 = vmatprep.subr.mxu0 %v555
  %815 = vmatpush2.msra.mxu0 %v554
  %816 = vmatprep.subr.mxu0 %v547
  %817 = vmatpush2.msra.mxu0 %v546
  %818 = vmatprep.subr.mxu0 %v539
  %819 = vmatpush2.msra.mxu0 %v538
  %820 = vmatprep.subr.mxu0 %v531
  %821 = vmatpush2.msra.mxu0 %v530
  %822 = vmatprep.subr.mxu0 %v523
  %823 = vmatpush2.msra.mxu0 %v522
  %824 = vmatprep.subr.mxu0 %v515
  %825 = vmatpush2.msra.mxu0 %v514
  %826 = vmatprep.subr.mxu0 %v507
  %827 = vmatpush2.msra.mxu0 %v506
  %828 = vmatprep.subr.mxu0 %v499
  %829 = vmatpush2.msra.mxu0 %v498
  %830 = vmatprep.subr.mxu0 %v491
  %831 = vmatpush2.msra.mxu0 %v490
  %832 = vmatprep.subr.mxu0 %v483
  %833 = vmatpush2.msra.mxu0 %v482
  %834 = vmatprep.subr.mxu0 %v475
  %835 = vmatpush2.msra.mxu0 %v474
  %836 = vmatprep.subr.mxu0 %v467
  %837 = vmatpush2.msra.mxu0 %v466
  %838 = vmatprep.mubr.f32.mxu0 %v333
  %839 = vmatmul.mubr.f32.gmra.mxu0 %v332
  %v840 = vpop.f32.mrf.mxu0
  %v841 = vadd.f32 %v611, %v840
  %v842 = vpop.f32.mrf.mxu0
  %v843 = vadd.f32 %v615, %v842
  %844 = vdwg.mxu0
  %845 = vmatprep.subr.mxu0 %v461
  %846 = vmatpush1.msra.mxu0 %v460
  %847 = vmatprep.subr.mxu0 %v453
  %848 = vmatpush1.msra.mxu0 %v452
  %849 = vmatprep.subr.mxu0 %v445
  %850 = vmatpush1.msra.mxu0 %v444
  %851 = vmatprep.subr.mxu0 %v437
  %852 = vmatpush1.msra.mxu0 %v436
  %853 = vmatprep.subr.mxu0 %v429
  %854 = vmatpush1.msra.mxu0 %v428
  %855 = vmatprep.subr.mxu0 %v421
  %856 = vmatpush1.msra.mxu0 %v420
  %857 = vmatprep.subr.mxu0 %v413
  %858 = vmatpush1.msra.mxu0 %v412
  %859 = vmatprep.subr.mxu0 %v405
  %860 = vmatpush1.msra.mxu0 %v404
  %861 = vmatprep.subr.mxu0 %v397
  %862 = vmatpush1.msra.mxu0 %v396
  %863 = vmatprep.subr.mxu0 %v389
  %864 = vmatpush1.msra.mxu0 %v388
  %865 = vmatprep.subr.mxu0 %v381
  %866 = vmatpush1.msra.mxu0 %v380
  %867 = vmatprep.subr.mxu0 %v373
  %868 = vmatpush1.msra.mxu0 %v372
  %869 = vmatprep.subr.mxu0 %v365
  %870 = vmatpush1.msra.mxu0 %v364
  %871 = vmatprep.subr.mxu0 %v357
  %872 = vmatpush1.msra.mxu0 %v356
  %873 = vmatprep.subr.mxu0 %v349
  %874 = vmatpush1.msra.mxu0 %v348
  %875 = vmatprep.subr.mxu0 %v341
  %876 = vmatpush1.msra.mxu0 %v340
  %877 = vmatprep.subr.mxu0 %v589
  %878 = vmatpush2.msra.mxu0 %v588
  %879 = vmatprep.subr.mxu0 %v581
  %880 = vmatpush2.msra.mxu0 %v580
  %881 = vmatprep.subr.mxu0 %v573
  %882 = vmatpush2.msra.mxu0 %v572
  %883 = vmatprep.subr.mxu0 %v565
  %884 = vmatpush2.msra.mxu0 %v564
  %885 = vmatprep.subr.mxu0 %v557
  %886 = vmatpush2.msra.mxu0 %v556
  %887 = vmatprep.subr.mxu0 %v549
  %888 = vmatpush2.msra.mxu0 %v548
  %889 = vmatprep.subr.mxu0 %v541
  %890 = vmatpush2.msra.mxu0 %v540
  %891 = vmatprep.subr.mxu0 %v533
  %892 = vmatpush2.msra.mxu0 %v532
  %893 = vmatprep.subr.mxu0 %v525
  %894 = vmatpush2.msra.mxu0 %v524
  %895 = vmatprep.subr.mxu0 %v517
  %896 = vmatpush2.msra.mxu0 %v516
  %897 = vmatprep.subr.mxu0 %v509
  %898 = vmatpush2.msra.mxu0 %v508
  %899 = vmatprep.subr.mxu0 %v501
  %900 = vmatpush2.msra.mxu0 %v500
  %901 = vmatprep.subr.mxu0 %v493
  %902 = vmatpush2.msra.mxu0 %v492
  %903 = vmatprep.subr.mxu0 %v485
  %904 = vmatpush2.msra.mxu0 %v484
  %905 = vmatprep.subr.mxu0 %v477
  %906 = vmatpush2.msra.mxu0 %v476
  %907 = vmatprep.subr.mxu0 %v469
  %908 = vmatpush2.msra.mxu0 %v468
  %909 = vmatprep.mubr.f32.mxu0 %v333
  %910 = vmatmul.mubr.f32.gmra.mxu0 %v332
  %v911 = vpop.f32.mrf.mxu0
  %v912 = vadd.f32 %v619, %v911
  %v913 = vpop.f32.mrf.mxu0
  %v914 = vadd.f32 %v623, %v913
  %915 = vdwg.mxu0
  %v916 = vmax.f32 %v699, 0.0
  %v917 = vmax.f32 %v701, 0.0
  %v918 = vmax.f32 %v770, 0.0
  %v919 = vmax.f32 %v772, 0.0
  %v920 = vmax.f32 %v841, 0.0
  %v921 = vmax.f32 %v843, 0.0
  %v922 = vmax.f32 %v912, 0.0
  %v923 = vmax.f32 %v914, 0.0
  %v924 = vld [vmem:[%s9] sm:$0xff]
  %v925 = vld [vmem:[%s9 + $0x8] sm:$0xff]
  %v926 = vld [vmem:[%s9 + $0x10] sm:$0xff]
  %v927 = vld [vmem:[%s9 + $0x18] sm:$0xff]
  %v928 = vld [vmem:[%s9 + $0x20] sm:$0xff]
  %v929 = vld [vmem:[%s9 + $0x28] sm:$0xff]
  %v930 = vld [vmem:[%s9 + $0x30] sm:$0xff]
  %v931 = vld [vmem:[%s9 + $0x38] sm:$0xff]
  %v932 = vld [vmem:[%s9 + $0x40] sm:$0xff]
  %v933 = vld [vmem:[%s9 + $0x48] sm:$0xff]
  %v934 = vld [vmem:[%s9 + $0x50] sm:$0xff]
  %v935 = vld [vmem:[%s9 + $0x58] sm:$0xff]
  %v936 = vld [vmem:[%s9 + $0x60] sm:$0xff]
  %v937 = vld [vmem:[%s9 + $0x68] sm:$0xff]
  %v938 = vld [vmem:[%s9 + $0x70] sm:$0xff]
  %v939 = vld [vmem:[%s9 + $0x78] sm:$0xff]
  %v940 = vld [vmem:[%s9 + $0x80] sm:$0xff]
  %v941 = vld [vmem:[%s9 + $0x88] sm:$0xff]
  %v942 = vld [vmem:[%s9 + $0x90] sm:$0xff]
  %v943 = vld [vmem:[%s9 + $0x98] sm:$0xff]
  %v944 = vld [vmem:[%s9 + $0xa0] sm:$0xff]
  %v945 = vld [vmem:[%s9 + $0xa8] sm:$0xff]
  %v946 = vld [vmem:[%s9 + $0xb0] sm:$0xff]
  %v947 = vld [vmem:[%s9 + $0xb8] sm:$0xff]
  %v948 = vld [vmem:[%s9 + $0xc0] sm:$0xff]
  %v949 = vld [vmem:[%s9 + $0xc8] sm:$0xff]
  %v950 = vld [vmem:[%s9 + $0xd0] sm:$0xff]
  %v951 = vld [vmem:[%s9 + $0xd8] sm:$0xff]
  %v952 = vld [vmem:[%s9 + $0xe0] sm:$0xff]
  %v953 = vld [vmem:[%s9 + $0xe8] sm:$0xff]
  %v954 = vld [vmem:[%s9 + $0xf0] sm:$0xff]
  %v955 = vld [vmem:[%s9 + $0xf8] sm:$0xff]
  %v956 = vld [vmem:[%s9 + $0x100] sm:$0xff]
  %v957 = vld [vmem:[%s9 + $0x108] sm:$0xff]
  %v958 = vld [vmem:[%s9 + $0x110] sm:$0xff]
  %v959 = vld [vmem:[%s9 + $0x118] sm:$0xff]
  %v960 = vld [vmem:[%s9 + $0x120] sm:$0xff]
  %v961 = vld [vmem:[%s9 + $0x128] sm:$0xff]
  %v962 = vld [vmem:[%s9 + $0x130] sm:$0xff]
  %v963 = vld [vmem:[%s9 + $0x138] sm:$0xff]
  %v964 = vld [vmem:[%s9 + $0x140] sm:$0xff]
  %v965 = vld [vmem:[%s9 + $0x148] sm:$0xff]
  %v966 = vld [vmem:[%s9 + $0x150] sm:$0xff]
  %v967 = vld [vmem:[%s9 + $0x158] sm:$0xff]
  %v968 = vld [vmem:[%s9 + $0x160] sm:$0xff]
  %v969 = vld [vmem:[%s9 + $0x168] sm:$0xff]
  %v970 = vld [vmem:[%s9 + $0x170] sm:$0xff]
  %v971 = vld [vmem:[%s9 + $0x178] sm:$0xff]
  %v972 = vld [vmem:[%s9 + $0x180] sm:$0xff]
  %v973 = vld [vmem:[%s9 + $0x188] sm:$0xff]
  %v974 = vld [vmem:[%s9 + $0x190] sm:$0xff]
  %v975 = vld [vmem:[%s9 + $0x198] sm:$0xff]
  %v976 = vld [vmem:[%s9 + $0x1a0] sm:$0xff]
  %v977 = vld [vmem:[%s9 + $0x1a8] sm:$0xff]
  %v978 = vld [vmem:[%s9 + $0x1b0] sm:$0xff]
  %v979 = vld [vmem:[%s9 + $0x1b8] sm:$0xff]
  %v980 = vld [vmem:[%s9 + $0x1c0] sm:$0xff]
  %v981 = vld [vmem:[%s9 + $0x1c8] sm:$0xff]
  %v982 = vld [vmem:[%s9 + $0x1d0] sm:$0xff]
  %v983 = vld [vmem:[%s9 + $0x1d8] sm:$0xff]
  %v984 = vld [vmem:[%s9 + $0x1e0] sm:$0xff]
  %v985 = vld [vmem:[%s9 + $0x1e8] sm:$0xff]
  %v986 = vld [vmem:[%s9 + $0x1f0] sm:$0xff]
  %v987 = vld [vmem:[%s9 + $0x1f8] sm:$0xff]
  %v988 = vld [vmem:[%s9 + $0x200] sm:$0xff]
  %v989 = vld [vmem:[%s9 + $0x208] sm:$0xff]
  %v990 = vld [vmem:[%s9 + $0x210] sm:$0xff]
  %v991 = vld [vmem:[%s9 + $0x218] sm:$0xff]
  %v992 = vld [vmem:[%s9 + $0x220] sm:$0xff]
  %v993 = vld [vmem:[%s9 + $0x228] sm:$0xff]
  %v994 = vld [vmem:[%s9 + $0x230] sm:$0xff]
  %v995 = vld [vmem:[%s9 + $0x238] sm:$0xff]
  %v996 = vld [vmem:[%s9 + $0x240] sm:$0xff]
  %v997 = vld [vmem:[%s9 + $0x248] sm:$0xff]
  %v998 = vld [vmem:[%s9 + $0x250] sm:$0xff]
  %v999 = vld [vmem:[%s9 + $0x258] sm:$0xff]
  %v1000 = vld [vmem:[%s9 + $0x260] sm:$0xff]
  %v1001 = vld [vmem:[%s9 + $0x268] sm:$0xff]
  %v1002 = vld [vmem:[%s9 + $0x270] sm:$0xff]
  %v1003 = vld [vmem:[%s9 + $0x278] sm:$0xff]
  %v1004 = vld [vmem:[%s9 + $0x280] sm:$0xff]
  %v1005 = vld [vmem:[%s9 + $0x288] sm:$0xff]
  %v1006 = vld [vmem:[%s9 + $0x290] sm:$0xff]
  %v1007 = vld [vmem:[%s9 + $0x298] sm:$0xff]
  %v1008 = vld [vmem:[%s9 + $0x2a0] sm:$0xff]
  %v1009 = vld [vmem:[%s9 + $0x2a8] sm:$0xff]
  %v1010 = vld [vmem:[%s9 + $0x2b0] sm:$0xff]
  %v1011 = vld [vmem:[%s9 + $0x2b8] sm:$0xff]
  %v1012 = vld [vmem:[%s9 + $0x2c0] sm:$0xff]
  %v1013 = vld [vmem:[%s9 + $0x2c8] sm:$0xff]
  %v1014 = vld [vmem:[%s9 + $0x2d0] sm:$0xff]
  %v1015 = vld [vmem:[%s9 + $0x2d8] sm:$0xff]
  %v1016 = vld [vmem:[%s9 + $0x2e0] sm:$0xff]
  %v1017 = vld [vmem:[%s9 + $0x2e8] sm:$0xff]
  %v1018 = vld [vmem:[%s9 + $0x2f0] sm:$0xff]
  %v1019 = vld [vmem:[%s9 + $0x2f8] sm:$0xff]
  %v1020 = vld [vmem:[%s9 + $0x300] sm:$0xff]
  %v1021 = vld [vmem:[%s9 + $0x308] sm:$0xff]
  %v1022 = vld [vmem:[%s9 + $0x310] sm:$0xff]
  %v1023 = vld [vmem:[%s9 + $0x318] sm:$0xff]
  %v1024 = vld [vmem:[%s9 + $0x320] sm:$0xff]
  %v1025 = vld [vmem:[%s9 + $0x328] sm:$0xff]
  %v1026 = vld [vmem:[%s9 + $0x330] sm:$0xff]
  %v1027 = vld [vmem:[%s9 + $0x338] sm:$0xff]
  %v1028 = vld [vmem:[%s9 + $0x340] sm:$0xff]
  %v1029 = vld [vmem:[%s9 + $0x348] sm:$0xff]
  %v1030 = vld [vmem:[%s9 + $0x350] sm:$0xff]
  %v1031 = vld [vmem:[%s9 + $0x358] sm:$0xff]
  %v1032 = vld [vmem:[%s9 + $0x360] sm:$0xff]
  %v1033 = vld [vmem:[%s9 + $0x368] sm:$0xff]
  %v1034 = vld [vmem:[%s9 + $0x370] sm:$0xff]
  %v1035 = vld [vmem:[%s9 + $0x378] sm:$0xff]
  %v1036 = vld [vmem:[%s9 + $0x380] sm:$0xff]
  %v1037 = vld [vmem:[%s9 + $0x388] sm:$0xff]
  %v1038 = vld [vmem:[%s9 + $0x390] sm:$0xff]
  %v1039 = vld [vmem:[%s9 + $0x398] sm:$0xff]
  %v1040 = vld [vmem:[%s9 + $0x3a0] sm:$0xff]
  %v1041 = vld [vmem:[%s9 + $0x3a8] sm:$0xff]
  %v1042 = vld [vmem:[%s9 + $0x3b0] sm:$0xff]
  %v1043 = vld [vmem:[%s9 + $0x3b8] sm:$0xff]
  %v1044 = vld [vmem:[%s9 + $0x3c0] sm:$0xff]
  %v1045 = vld [vmem:[%s9 + $0x3c8] sm:$0xff]
  %v1046 = vld [vmem:[%s9 + $0x3d0] sm:$0xff]
  %v1047 = vld [vmem:[%s9 + $0x3d8] sm:$0xff]
  %v1048 = vld [vmem:[%s9 + $0x3e0] sm:$0xff]
  %v1049 = vld [vmem:[%s9 + $0x3e8] sm:$0xff]
  %v1050 = vld [vmem:[%s9 + $0x3f0] sm:$0xff]
  %v1051 = vld [vmem:[%s9 + $0x3f8] sm:$0xff]
  %v1052 = vld [vmem:[%s9 + $0x400] sm:$0xff]
  %v1053 = vld [vmem:[%s9 + $0x408] sm:$0xff]
  %v1054 = vld [vmem:[%s9 + $0x410] sm:$0xff]
  %v1055 = vld [vmem:[%s9 + $0x418] sm:$0xff]
  %v1056 = vld [vmem:[%s9 + $0x420] sm:$0xff]
  %v1057 = vld [vmem:[%s9 + $0x428] sm:$0xff]
  %v1058 = vld [vmem:[%s9 + $0x430] sm:$0xff]
  %v1059 = vld [vmem:[%s9 + $0x438] sm:$0xff]
  %v1060 = vld [vmem:[%s9 + $0x440] sm:$0xff]
  %v1061 = vld [vmem:[%s9 + $0x448] sm:$0xff]
  %v1062 = vld [vmem:[%s9 + $0x450] sm:$0xff]
  %v1063 = vld [vmem:[%s9 + $0x458] sm:$0xff]
  %v1064 = vld [vmem:[%s9 + $0x460] sm:$0xff]
  %v1065 = vld [vmem:[%s9 + $0x468] sm:$0xff]
  %v1066 = vld [vmem:[%s9 + $0x470] sm:$0xff]
  %v1067 = vld [vmem:[%s9 + $0x478] sm:$0xff]
  %v1068 = vld [vmem:[%s9 + $0x480] sm:$0xff]
  %v1069 = vld [vmem:[%s9 + $0x488] sm:$0xff]
  %v1070 = vld [vmem:[%s9 + $0x490] sm:$0xff]
  %v1071 = vld [vmem:[%s9 + $0x498] sm:$0xff]
  %v1072 = vld [vmem:[%s9 + $0x4a0] sm:$0xff]
  %v1073 = vld [vmem:[%s9 + $0x4a8] sm:$0xff]
  %v1074 = vld [vmem:[%s9 + $0x4b0] sm:$0xff]
  %v1075 = vld [vmem:[%s9 + $0x4b8] sm:$0xff]
  %v1076 = vld [vmem:[%s9 + $0x4c0] sm:$0xff]
  %v1077 = vld [vmem:[%s9 + $0x4c8] sm:$0xff]
  %v1078 = vld [vmem:[%s9 + $0x4d0] sm:$0xff]
  %v1079 = vld [vmem:[%s9 + $0x4d8] sm:$0xff]
  %v1080 = vld [vmem:[%s9 + $0x4e0] sm:$0xff]
  %v1081 = vld [vmem:[%s9 + $0x4e8] sm:$0xff]
  %v1082 = vld [vmem:[%s9 + $0x4f0] sm:$0xff]
  %v1083 = vld [vmem:[%s9 + $0x4f8] sm:$0xff]
  %v1084 = vld [vmem:[%s9 + $0x500] sm:$0xff]
  %v1085 = vld [vmem:[%s9 + $0x508] sm:$0xff]
  %v1086 = vld [vmem:[%s9 + $0x510] sm:$0xff]
  %v1087 = vld [vmem:[%s9 + $0x518] sm:$0xff]
  %v1088 = vld [vmem:[%s9 + $0x520] sm:$0xff]
  %v1089 = vld [vmem:[%s9 + $0x528] sm:$0xff]
  %v1090 = vld [vmem:[%s9 + $0x530] sm:$0xff]
  %v1091 = vld [vmem:[%s9 + $0x538] sm:$0xff]
  %v1092 = vld [vmem:[%s9 + $0x540] sm:$0xff]
  %v1093 = vld [vmem:[%s9 + $0x548] sm:$0xff]
  %v1094 = vld [vmem:[%s9 + $0x550] sm:$0xff]
  %v1095 = vld [vmem:[%s9 + $0x558] sm:$0xff]
  %v1096 = vld [vmem:[%s9 + $0x560] sm:$0xff]
  %v1097 = vld [vmem:[%s9 + $0x568] sm:$0xff]
  %v1098 = vld [vmem:[%s9 + $0x570] sm:$0xff]
  %v1099 = vld [vmem:[%s9 + $0x578] sm:$0xff]
  %v1100 = vld [vmem:[%s9 + $0x580] sm:$0xff]
  %v1101 = vld [vmem:[%s9 + $0x588] sm:$0xff]
  %v1102 = vld [vmem:[%s9 + $0x590] sm:$0xff]
  %v1103 = vld [vmem:[%s9 + $0x598] sm:$0xff]
  %v1104 = vld [vmem:[%s9 + $0x5a0] sm:$0xff]
  %v1105 = vld [vmem:[%s9 + $0x5a8] sm:$0xff]
  %v1106 = vld [vmem:[%s9 + $0x5b0] sm:$0xff]
  %v1107 = vld [vmem:[%s9 + $0x5b8] sm:$0xff]
  %v1108 = vld [vmem:[%s9 + $0x5c0] sm:$0xff]
  %v1109 = vld [vmem:[%s9 + $0x5c8] sm:$0xff]
  %v1110 = vld [vmem:[%s9 + $0x5d0] sm:$0xff]
  %v1111 = vld [vmem:[%s9 + $0x5d8] sm:$0xff]
  %v1112 = vld [vmem:[%s9 + $0x5e0] sm:$0xff]
  %v1113 = vld [vmem:[%s9 + $0x5e8] sm:$0xff]
  %v1114 = vld [vmem:[%s9 + $0x5f0] sm:$0xff]
  %v1115 = vld [vmem:[%s9 + $0x5f8] sm:$0xff]
  %v1116 = vld [vmem:[%s9 + $0x600] sm:$0xff]
  %v1117 = vld [vmem:[%s9 + $0x608] sm:$0xff]
  %v1118 = vld [vmem:[%s9 + $0x610] sm:$0xff]
  %v1119 = vld [vmem:[%s9 + $0x618] sm:$0xff]
  %v1120 = vld [vmem:[%s9 + $0x620] sm:$0xff]
  %v1121 = vld [vmem:[%s9 + $0x628] sm:$0xff]
  %v1122 = vld [vmem:[%s9 + $0x630] sm:$0xff]
  %v1123 = vld [vmem:[%s9 + $0x638] sm:$0xff]
  %v1124 = vld [vmem:[%s9 + $0x640] sm:$0xff]
  %v1125 = vld [vmem:[%s9 + $0x648] sm:$0xff]
  %v1126 = vld [vmem:[%s9 + $0x650] sm:$0xff]
  %v1127 = vld [vmem:[%s9 + $0x658] sm:$0xff]
  %v1128 = vld [vmem:[%s9 + $0x660] sm:$0xff]
  %v1129 = vld [vmem:[%s9 + $0x668] sm:$0xff]
  %v1130 = vld [vmem:[%s9 + $0x670] sm:$0xff]
  %v1131 = vld [vmem:[%s9 + $0x678] sm:$0xff]
  %v1132 = vld [vmem:[%s9 + $0x680] sm:$0xff]
  %v1133 = vld [vmem:[%s9 + $0x688] sm:$0xff]
  %v1134 = vld [vmem:[%s9 + $0x690] sm:$0xff]
  %v1135 = vld [vmem:[%s9 + $0x698] sm:$0xff]
  %v1136 = vld [vmem:[%s9 + $0x6a0] sm:$0xff]
  %v1137 = vld [vmem:[%s9 + $0x6a8] sm:$0xff]
  %v1138 = vld [vmem:[%s9 + $0x6b0] sm:$0xff]
  %v1139 = vld [vmem:[%s9 + $0x6b8] sm:$0xff]
  %v1140 = vld [vmem:[%s9 + $0x6c0] sm:$0xff]
  %v1141 = vld [vmem:[%s9 + $0x6c8] sm:$0xff]
  %v1142 = vld [vmem:[%s9 + $0x6d0] sm:$0xff]
  %v1143 = vld [vmem:[%s9 + $0x6d8] sm:$0xff]
  %v1144 = vld [vmem:[%s9 + $0x6e0] sm:$0xff]
  %v1145 = vld [vmem:[%s9 + $0x6e8] sm:$0xff]
  %v1146 = vld [vmem:[%s9 + $0x6f0] sm:$0xff]
  %v1147 = vld [vmem:[%s9 + $0x6f8] sm:$0xff]
  %v1148 = vld [vmem:[%s9 + $0x700] sm:$0xff]
  %v1149 = vld [vmem:[%s9 + $0x708] sm:$0xff]
  %v1150 = vld [vmem:[%s9 + $0x710] sm:$0xff]
  %v1151 = vld [vmem:[%s9 + $0x718] sm:$0xff]
  %v1152 = vld [vmem:[%s9 + $0x720] sm:$0xff]
  %v1153 = vld [vmem:[%s9 + $0x728] sm:$0xff]
  %v1154 = vld [vmem:[%s9 + $0x730] sm:$0xff]
  %v1155 = vld [vmem:[%s9 + $0x738] sm:$0xff]
  %v1156 = vld [vmem:[%s9 + $0x740] sm:$0xff]
  %v1157 = vld [vmem:[%s9 + $0x748] sm:$0xff]
  %v1158 = vld [vmem:[%s9 + $0x750] sm:$0xff]
  %v1159 = vld [vmem:[%s9 + $0x758] sm:$0xff]
  %v1160 = vld [vmem:[%s9 + $0x760] sm:$0xff]
  %v1161 = vld [vmem:[%s9 + $0x768] sm:$0xff]
  %v1162 = vld [vmem:[%s9 + $0x770] sm:$0xff]
  %v1163 = vld [vmem:[%s9 + $0x778] sm:$0xff]
  %v1164 = vld [vmem:[%s9 + $0x780] sm:$0xff]
  %v1165 = vld [vmem:[%s9 + $0x788] sm:$0xff]
  %v1166 = vld [vmem:[%s9 + $0x790] sm:$0xff]
  %v1167 = vld [vmem:[%s9 + $0x798] sm:$0xff]
  %v1168 = vld [vmem:[%s9 + $0x7a0] sm:$0xff]
  %v1169 = vld [vmem:[%s9 + $0x7a8] sm:$0xff]
  %v1170 = vld [vmem:[%s9 + $0x7b0] sm:$0xff]
  %v1171 = vld [vmem:[%s9 + $0x7b8] sm:$0xff]
  %v1172 = vld [vmem:[%s9 + $0x7c0] sm:$0xff]
  %v1173 = vld [vmem:[%s9 + $0x7c8] sm:$0xff]
  %v1174 = vld [vmem:[%s9 + $0x7d0] sm:$0xff]
  %v1175 = vld [vmem:[%s9 + $0x7d8] sm:$0xff]
  %v1176 = vld [vmem:[%s9 + $0x7e0] sm:$0xff]
  %v1177 = vld [vmem:[%s9 + $0x7e8] sm:$0xff]
  %v1178 = vld [vmem:[%s9 + $0x7f0] sm:$0xff]
  %v1179 = vld [vmem:[%s9 + $0x7f8] sm:$0xff]
  %v1180 = vld [vmem:[%s10] sm:$0x3]
  %v1182 = vlaneseq
  %v1183 = vshrl.u32 %v1182, 7
  %v1184 = vsub.s32 0, %v1183
  %v1185 = vrot.slane %v1180, %v1184
  %v1186 = vlaneseq
  %v1187 = vshrl.u32 %v1186, 7
  %v1188 = vsub.s32 1, %v1187
  %v1189 = vrot.slane %v1180, %v1188
  %1192 = vmatprep.subr.mxu0 %v955
  %1193 = vmatpush1.msra.mxu0 %v954
  %1194 = vmatprep.subr.mxu0 %v953
  %1195 = vmatpush1.msra.mxu0 %v952
  %1196 = vmatprep.subr.mxu0 %v951
  %1197 = vmatpush1.msra.mxu0 %v950
  %1198 = vmatprep.subr.mxu0 %v949
  %1199 = vmatpush1.msra.mxu0 %v948
  %1200 = vmatprep.subr.mxu0 %v947
  %1201 = vmatpush1.msra.mxu0 %v946
  %1202 = vmatprep.subr.mxu0 %v945
  %1203 = vmatpush1.msra.mxu0 %v944
  %1204 = vmatprep.subr.mxu0 %v943
  %1205 = vmatpush1.msra.mxu0 %v942
  %1206 = vmatprep.subr.mxu0 %v941
  %1207 = vmatpush1.msra.mxu0 %v940
  %1208 = vmatprep.subr.mxu0 %v939
  %1209 = vmatpush1.msra.mxu0 %v938
  %1210 = vmatprep.subr.mxu0 %v937
  %1211 = vmatpush1.msra.mxu0 %v936
  %1212 = vmatprep.subr.mxu0 %v935
  %1213 = vmatpush1.msra.mxu0 %v934
  %1214 = vmatprep.subr.mxu0 %v933
  %1215 = vmatpush1.msra.mxu0 %v932
  %1216 = vmatprep.subr.mxu0 %v931
  %1217 = vmatpush1.msra.mxu0 %v930
  %1218 = vmatprep.subr.mxu0 %v929
  %1219 = vmatpush1.msra.mxu0 %v928
  %1220 = vmatprep.subr.mxu0 %v927
  %1221 = vmatpush1.msra.mxu0 %v926
  %1222 = vmatprep.subr.mxu0 %v925
  %1223 = vmatpush1.msra.mxu0 %v924
  %1224 = vmatprep.subr.mxu0 %v987
  %1225 = vmatpush2.msra.mxu0 %v986
  %1226 = vmatprep.subr.mxu0 %v985
  %1227 = vmatpush2.msra.mxu0 %v984
  %1228 = vmatprep.subr.mxu0 %v983
  %1229 = vmatpush2.msra.mxu0 %v982
  %1230 = vmatprep.subr.mxu0 %v981
  %1231 = vmatpush2.msra.mxu0 %v980
  %1232 = vmatprep.subr.mxu0 %v979
  %1233 = vmatpush2.msra.mxu0 %v978
  %1234 = vmatprep.subr.mxu0 %v977
  %1235 = vmatpush2.msra.mxu0 %v976
  %1236 = vmatprep.subr.mxu0 %v975
  %1237 = vmatpush2.msra.mxu0 %v974
  %1238 = vmatprep.subr.mxu0 %v973
  %1239 = vmatpush2.msra.mxu0 %v972
  %1240 = vmatprep.subr.mxu0 %v971
  %1241 = vmatpush2.msra.mxu0 %v970
  %1242 = vmatprep.subr.mxu0 %v969
  %1243 = vmatpush2.msra.mxu0 %v968
  %1244 = vmatprep.subr.mxu0 %v967
  %1245 = vmatpush2.msra.mxu0 %v966
  %1246 = vmatprep.subr.mxu0 %v965
  %1247 = vmatpush2.msra.mxu0 %v964
  %1248 = vmatprep.subr.mxu0 %v963
  %1249 = vmatpush2.msra.mxu0 %v962
  %1250 = vmatprep.subr.mxu0 %v961
  %1251 = vmatpush2.msra.mxu0 %v960
  %1252 = vmatprep.subr.mxu0 %v959
  %1253 = vmatpush2.msra.mxu0 %v958
  %1254 = vmatprep.subr.mxu0 %v957
  %1255 = vmatpush2.msra.mxu0 %v956
  %1256 = vmatprep.mubr.f32.mxu0 %v917
  %1257 = vmatmul.mubr.f32.gmra.mxu0 %v916
  %v1258 = vpop.f32.mrf.mxu0
  %v1259 = vadd.f32 %v1185, %v1258
  %v1260 = vpop.f32.mrf.mxu0
  %v1261 = vadd.f32 %v1189, %v1260
  %1262 = vdwg.mxu0
  %1263 = vmatprep.subr.mxu0 %v1019
  %1264 = vmatpush1.msra.mxu0 %v1018
  %1265 = vmatprep.subr.mxu0 %v1017
  %1266 = vmatpush1.msra.mxu0 %v1016
  %1267 = vmatprep.subr.mxu0 %v1015
  %1268 = vmatpush1.msra.mxu0 %v1014
  %1269 = vmatprep.subr.mxu0 %v1013
  %1270 = vmatpush1.msra.mxu0 %v1012
  %1271 = vmatprep.subr.mxu0 %v1011
  %1272 = vmatpush1.msra.mxu0 %v1010
  %1273 = vmatprep.subr.mxu0 %v1009
  %1274 = vmatpush1.msra.mxu0 %v1008
  %1275 = vmatprep.subr.mxu0 %v1007
  %1276 = vmatpush1.msra.mxu0 %v1006
  %1277 = vmatprep.subr.mxu0 %v1005
  %1278 = vmatpush1.msra.mxu0 %v1004
  %1279 = vmatprep.subr.mxu0 %v1003
  %1280 = vmatpush1.msra.mxu0 %v1002
  %1281 = vmatprep.subr.mxu0 %v1001
  %1282 = vmatpush1.msra.mxu0 %v1000
  %1283 = vmatprep.subr.mxu0 %v999
  %1284 = vmatpush1.msra.mxu0 %v998
  %1285 = vmatprep.subr.mxu0 %v997
  %1286 = vmatpush1.msra.mxu0 %v996
  %1287 = vmatprep.subr.mxu0 %v995
  %1288 = vmatpush1.msra.mxu0 %v994
  %1289 = vmatprep.subr.mxu0 %v993
  %1290 = vmatpush1.msra.mxu0 %v992
  %1291 = vmatprep.subr.mxu0 %v991
  %1292 = vmatpush1.msra.mxu0 %v990
  %1293 = vmatprep.subr.mxu0 %v989
  %1294 = vmatpush1.msra.mxu0 %v988
  %1295 = vmatprep.subr.mxu0 %v1051
  %1296 = vmatpush2.msra.mxu0 %v1050
  %1297 = vmatprep.subr.mxu0 %v1049
  %1298 = vmatpush2.msra.mxu0 %v1048
  %1299 = vmatprep.subr.mxu0 %v1047
  %1300 = vmatpush2.msra.mxu0 %v1046
  %1301 = vmatprep.subr.mxu0 %v1045
  %1302 = vmatpush2.msra.mxu0 %v1044
  %1303 = vmatprep.subr.mxu0 %v1043
  %1304 = vmatpush2.msra.mxu0 %v1042
  %1305 = vmatprep.subr.mxu0 %v1041
  %1306 = vmatpush2.msra.mxu0 %v1040
  %1307 = vmatprep.subr.mxu0 %v1039
  %1308 = vmatpush2.msra.mxu0 %v1038
  %1309 = vmatprep.subr.mxu0 %v1037
  %1310 = vmatpush2.msra.mxu0 %v1036
  %1311 = vmatprep.subr.mxu0 %v1035
  %1312 = vmatpush2.msra.mxu0 %v1034
  %1313 = vmatprep.subr.mxu0 %v1033
  %1314 = vmatpush2.msra.mxu0 %v1032
  %1315 = vmatprep.subr.mxu0 %v1031
  %1316 = vmatpush2.msra.mxu0 %v1030
  %1317 = vmatprep.subr.mxu0 %v1029
  %1318 = vmatpush2.msra.mxu0 %v1028
  %1319 = vmatprep.subr.mxu0 %v1027
  %1320 = vmatpush2.msra.mxu0 %v1026
  %1321 = vmatprep.subr.mxu0 %v1025
  %1322 = vmatpush2.msra.mxu0 %v1024
  %1323 = vmatprep.subr.mxu0 %v1023
  %1324 = vmatpush2.msra.mxu0 %v1022
  %1325 = vmatprep.subr.mxu0 %v1021
  %1326 = vmatpush2.msra.mxu0 %v1020
  %1327 = vmatprep.mubr.f32.mxu0 %v919
  %1328 = vmatmul.mubr.f32.gmra.mxu0 %v918
  %v1329 = vpop.f32.mrf.mxu0
  %v1330 = vadd.f32 %v1259, %v1329
  %v1331 = vpop.f32.mrf.mxu0
  %v1332 = vadd.f32 %v1261, %v1331
  %1333 = vdwg.mxu0
  %1334 = vmatprep.subr.mxu0 %v1083
  %1335 = vmatpush1.msra.mxu0 %v1082
  %1336 = vmatprep.subr.mxu0 %v1081
  %1337 = vmatpush1.msra.mxu0 %v1080
  %1338 = vmatprep.subr.mxu0 %v1079
  %1339 = vmatpush1.msra.mxu0 %v1078
  %1340 = vmatprep.subr.mxu0 %v1077
  %1341 = vmatpush1.msra.mxu0 %v1076
  %1342 = vmatprep.subr.mxu0 %v1075
  %1343 = vmatpush1.msra.mxu0 %v1074
  %1344 = vmatprep.subr.mxu0 %v1073
  %1345 = vmatpush1.msra.mxu0 %v1072
  %1346 = vmatprep.subr.mxu0 %v1071
  %1347 = vmatpush1.msra.mxu0 %v1070
  %1348 = vmatprep.subr.mxu0 %v1069
  %1349 = vmatpush1.msra.mxu0 %v1068
  %1350 = vmatprep.subr.mxu0 %v1067
  %1351 = vmatpush1.msra.mxu0 %v1066
  %1352 = vmatprep.subr.mxu0 %v1065
  %1353 = vmatpush1.msra.mxu0 %v1064
  %1354 = vmatprep.subr.mxu0 %v1063
  %1355 = vmatpush1.msra.mxu0 %v1062
  %1356 = vmatprep.subr.mxu0 %v1061
  %1357 = vmatpush1.msra.mxu0 %v1060
  %1358 = vmatprep.subr.mxu0 %v1059
  %1359 = vmatpush1.msra.mxu0 %v1058
  %1360 = vmatprep.subr.mxu0 %v1057
  %1361 = vmatpush1.msra.mxu0 %v1056
  %1362 = vmatprep.subr.mxu0 %v1055
  %1363 = vmatpush1.msra.mxu0 %v1054
  %1364 = vmatprep.subr.mxu0 %v1053
  %1365 = vmatpush1.msra.mxu0 %v1052
  %1366 = vmatprep.subr.mxu0 %v1115
  %1367 = vmatpush2.msra.mxu0 %v1114
  %1368 = vmatprep.subr.mxu0 %v1113
  %1369 = vmatpush2.msra.mxu0 %v1112
  %1370 = vmatprep.subr.mxu0 %v1111
  %1371 = vmatpush2.msra.mxu0 %v1110
  %1372 = vmatprep.subr.mxu0 %v1109
  %1373 = vmatpush2.msra.mxu0 %v1108
  %1374 = vmatprep.subr.mxu0 %v1107
  %1375 = vmatpush2.msra.mxu0 %v1106
  %1376 = vmatprep.subr.mxu0 %v1105
  %1377 = vmatpush2.msra.mxu0 %v1104
  %1378 = vmatprep.subr.mxu0 %v1103
  %1379 = vmatpush2.msra.mxu0 %v1102
  %1380 = vmatprep.subr.mxu0 %v1101
  %1381 = vmatpush2.msra.mxu0 %v1100
  %1382 = vmatprep.subr.mxu0 %v1099
  %1383 = vmatpush2.msra.mxu0 %v1098
  %1384 = vmatprep.subr.mxu0 %v1097
  %1385 = vmatpush2.msra.mxu0 %v1096
  %1386 = vmatprep.subr.mxu0 %v1095
  %1387 = vmatpush2.msra.mxu0 %v1094
  %1388 = vmatprep.subr.mxu0 %v1093
  %1389 = vmatpush2.msra.mxu0 %v1092
  %1390 = vmatprep.subr.mxu0 %v1091
  %1391 = vmatpush2.msra.mxu0 %v1090
  %1392 = vmatprep.subr.mxu0 %v1089
  %1393 = vmatpush2.msra.mxu0 %v1088
  %1394 = vmatprep.subr.mxu0 %v1087
  %1395 = vmatpush2.msra.mxu0 %v1086
  %1396 = vmatprep.subr.mxu0 %v1085
  %1397 = vmatpush2.msra.mxu0 %v1084
  %1398 = vmatprep.mubr.f32.mxu0 %v921
  %1399 = vmatmul.mubr.f32.gmra.mxu0 %v920
  %v1400 = vpop.f32.mrf.mxu0
  %v1401 = vadd.f32 %v1330, %v1400
  %v1402 = vpop.f32.mrf.mxu0
  %v1403 = vadd.f32 %v1332, %v1402
  %1404 = vdwg.mxu0
  %1405 = vmatprep.subr.mxu0 %v1147
  %1406 = vmatpush1.msra.mxu0 %v1146
  %1407 = vmatprep.subr.mxu0 %v1145
  %1408 = vmatpush1.msra.mxu0 %v1144
  %1409 = vmatprep.subr.mxu0 %v1143
  %1410 = vmatpush1.msra.mxu0 %v1142
  %1411 = vmatprep.subr.mxu0 %v1141
  %1412 = vmatpush1.msra.mxu0 %v1140
  %1413 = vmatprep.subr.mxu0 %v1139
  %1414 = vmatpush1.msra.mxu0 %v1138
  %1415 = vmatprep.subr.mxu0 %v1137
  %1416 = vmatpush1.msra.mxu0 %v1136
  %1417 = vmatprep.subr.mxu0 %v1135
  %1418 = vmatpush1.msra.mxu0 %v1134
  %1419 = vmatprep.subr.mxu0 %v1133
  %1420 = vmatpush1.msra.mxu0 %v1132
  %1421 = vmatprep.subr.mxu0 %v1131
  %1422 = vmatpush1.msra.mxu0 %v1130
  %1423 = vmatprep.subr.mxu0 %v1129
  %1424 = vmatpush1.msra.mxu0 %v1128
  %1425 = vmatprep.subr.mxu0 %v1127
  %1426 = vmatpush1.msra.mxu0 %v1126
  %1427 = vmatprep.subr.mxu0 %v1125
  %1428 = vmatpush1.msra.mxu0 %v1124
  %1429 = vmatprep.subr.mxu0 %v1123
  %1430 = vmatpush1.msra.mxu0 %v1122
  %1431 = vmatprep.subr.mxu0 %v1121
  %1432 = vmatpush1.msra.mxu0 %v1120
  %1433 = vmatprep.subr.mxu0 %v1119
  %1434 = vmatpush1.msra.mxu0 %v1118
  %1435 = vmatprep.subr.mxu0 %v1117
  %1436 = vmatpush1.msra.mxu0 %v1116
  %1437 = vmatprep.subr.mxu0 %v1179
  %1438 = vmatpush2.msra.mxu0 %v1178
  %1439 = vmatprep.subr.mxu0 %v1177
  %1440 = vmatpush2.msra.mxu0 %v1176
  %1441 = vmatprep.subr.mxu0 %v1175
  %1442 = vmatpush2.msra.mxu0 %v1174
  %1443 = vmatprep.subr.mxu0 %v1173
  %1444 = vmatpush2.msra.mxu0 %v1172
  %1445 = vmatprep.subr.mxu0 %v1171
  %1446 = vmatpush2.msra.mxu0 %v1170
  %1447 = vmatprep.subr.mxu0 %v1169
  %1448 = vmatpush2.msra.mxu0 %v1168
  %1449 = vmatprep.subr.mxu0 %v1167
  %1450 = vmatpush2.msra.mxu0 %v1166
  %1451 = vmatprep.subr.mxu0 %v1165
  %1452 = vmatpush2.msra.mxu0 %v1164
  %1453 = vmatprep.subr.mxu0 %v1163
  %1454 = vmatpush2.msra.mxu0 %v1162
  %1455 = vmatprep.subr.mxu0 %v1161
  %1456 = vmatpush2.msra.mxu0 %v1160
  %1457 = vmatprep.subr.mxu0 %v1159
  %1458 = vmatpush2.msra.mxu0 %v1158
  %1459 = vmatprep.subr.mxu0 %v1157
  %1460 = vmatpush2.msra.mxu0 %v1156
  %1461 = vmatprep.subr.mxu0 %v1155
  %1462 = vmatpush2.msra.mxu0 %v1154
  %1463 = vmatprep.subr.mxu0 %v1153
  %1464 = vmatpush2.msra.mxu0 %v1152
  %1465 = vmatprep.subr.mxu0 %v1151
  %1466 = vmatpush2.msra.mxu0 %v1150
  %1467 = vmatprep.subr.mxu0 %v1149
  %1468 = vmatpush2.msra.mxu0 %v1148
  %1469 = vmatprep.mubr.f32.mxu0 %v923
  %1470 = vmatmul.mubr.f32.gmra.mxu0 %v922
  %v1471 = vpop.f32.mrf.mxu0
  %v1472 = vadd.f32 %v1401, %v1471
  %v1473 = vpop.f32.mrf.mxu0
  %v1474 = vadd.f32 %v1403, %v1473
  %1475 = vdwg.mxu0
  %v1476 = vld [vmem:[%s11] sm:$0xff]
  %v1477 = vld [vmem:[%s11 + $0x8] sm:$0xff]
  %v1478 = vld [vmem:[%s11 + $0x10] sm:$0xff]
  %v1479 = vld [vmem:[%s11 + $0x18] sm:$0xff]
  %v1480 = vld [vmem:[%s11 + $0x20] sm:$0xff]
  %v1481 = vld [vmem:[%s11 + $0x28] sm:$0xff]
  %v1482 = vld [vmem:[%s11 + $0x30] sm:$0xff]
  %v1483 = vld [vmem:[%s11 + $0x38] sm:$0xff]
  %v1484 = vld [vmem:[%s11 + $0x40] sm:$0xff]
  %v1485 = vld [vmem:[%s11 + $0x48] sm:$0xff]
  %v1486 = vld [vmem:[%s11 + $0x50] sm:$0xff]
  %v1487 = vld [vmem:[%s11 + $0x58] sm:$0xff]
  %v1488 = vld [vmem:[%s11 + $0x60] sm:$0xff]
  %v1489 = vld [vmem:[%s11 + $0x68] sm:$0xff]
  %v1490 = vld [vmem:[%s11 + $0x70] sm:$0xff]
  %v1491 = vld [vmem:[%s11 + $0x78] sm:$0xff]
  %v1492 = vld [vmem:[%s11 + $0x80] sm:$0xff]
  %v1493 = vld [vmem:[%s11 + $0x88] sm:$0xff]
  %v1494 = vld [vmem:[%s11 + $0x90] sm:$0xff]
  %v1495 = vld [vmem:[%s11 + $0x98] sm:$0xff]
  %v1496 = vld [vmem:[%s11 + $0xa0] sm:$0xff]
  %v1497 = vld [vmem:[%s11 + $0xa8] sm:$0xff]
  %v1498 = vld [vmem:[%s11 + $0xb0] sm:$0xff]
  %v1499 = vld [vmem:[%s11 + $0xb8] sm:$0xff]
  %v1500 = vld [vmem:[%s11 + $0xc0] sm:$0xff]
  %v1501 = vld [vmem:[%s11 + $0xc8] sm:$0xff]
  %v1502 = vld [vmem:[%s11 + $0xd0] sm:$0xff]
  %v1503 = vld [vmem:[%s11 + $0xd8] sm:$0xff]
  %v1504 = vld [vmem:[%s11 + $0xe0] sm:$0xff]
  %v1505 = vld [vmem:[%s11 + $0xe8] sm:$0xff]
  %v1506 = vld [vmem:[%s11 + $0xf0] sm:$0xff]
  %v1507 = vld [vmem:[%s11 + $0xf8] sm:$0xff]
  %v1508 = vld [vmem:[%s12] sm:$0x1]
  %v1510 = vlaneseq
  %v1511 = vshrl.u32 %v1510, 7
  %v1512 = vsub.s32 0, %v1511
  %v1513 = vrot.slane %v1508, %v1512
  %1515 = vmatprep.subr.mxu0 0.0
  %1516 = vmatpush1.msra.mxu0 %v1491
  %1517 = vmatprep.subr.mxu0 0.0
  %1518 = vmatpush1.msra.mxu0 %v1490
  %1519 = vmatprep.subr.mxu0 0.0
  %1520 = vmatpush1.msra.mxu0 %v1489
  %1521 = vmatprep.subr.mxu0 0.0
  %1522 = vmatpush1.msra.mxu0 %v1488
  %1523 = vmatprep.subr.mxu0 0.0
  %1524 = vmatpush1.msra.mxu0 %v1487
  %1525 = vmatprep.subr.mxu0 0.0
  %1526 = vmatpush1.msra.mxu0 %v1486
  %1527 = vmatprep.subr.mxu0 0.0
  %1528 = vmatpush1.msra.mxu0 %v1485
  %1529 = vmatprep.subr.mxu0 0.0
  %1530 = vmatpush1.msra.mxu0 %v1484
  %1531 = vmatprep.subr.mxu0 0.0
  %1532 = vmatpush1.msra.mxu0 %v1483
  %1533 = vmatprep.subr.mxu0 0.0
  %1534 = vmatpush1.msra.mxu0 %v1482
  %1535 = vmatprep.subr.mxu0 0.0
  %1536 = vmatpush1.msra.mxu0 %v1481
  %1537 = vmatprep.subr.mxu0 0.0
  %1538 = vmatpush1.msra.mxu0 %v1480
  %1539 = vmatprep.subr.mxu0 0.0
  %1540 = vmatpush1.msra.mxu0 %v1479
  %1541 = vmatprep.subr.mxu0 0.0
  %1542 = vmatpush1.msra.mxu0 %v1478
  %1543 = vmatprep.subr.mxu0 0.0
  %1544 = vmatpush1.msra.mxu0 %v1477
  %1545 = vmatprep.subr.mxu0 0.0
  %1546 = vmatpush1.msra.mxu0 %v1476
  %1547 = vmatprep.subr.mxu0 0.0
  %1548 = vmatpush2.msra.mxu0 %v1507
  %1549 = vmatprep.subr.mxu0 0.0
  %1550 = vmatpush2.msra.mxu0 %v1506
  %1551 = vmatprep.subr.mxu0 0.0
  %1552 = vmatpush2.msra.mxu0 %v1505
  %1553 = vmatprep.subr.mxu0 0.0
  %1554 = vmatpush2.msra.mxu0 %v1504
  %1555 = vmatprep.subr.mxu0 0.0
  %1556 = vmatpush2.msra.mxu0 %v1503
  %1557 = vmatprep.subr.mxu0 0.0
  %1558 = vmatpush2.msra.mxu0 %v1502
  %1559 = vmatprep.subr.mxu0 0.0
  %1560 = vmatpush2.msra.mxu0 %v1501
  %1561 = vmatprep.subr.mxu0 0.0
  %1562 = vmatpush2.msra.mxu0 %v1500
  %1563 = vmatprep.subr.mxu0 0.0
  %1564 = vmatpush2.msra.mxu0 %v1499
  %1565 = vmatprep.subr.mxu0 0.0
  %1566 = vmatpush2.msra.mxu0 %v1498
  %1567 = vmatprep.subr.mxu0 0.0
  %1568 = vmatpush2.msra.mxu0 %v1497
  %1569 = vmatprep.subr.mxu0 0.0
  %1570 = vmatpush2.msra.mxu0 %v1496
  %1571 = vmatprep.subr.mxu0 0.0
  %1572 = vmatpush2.msra.mxu0 %v1495
  %1573 = vmatprep.subr.mxu0 0.0
  %1574 = vmatpush2.msra.mxu0 %v1494
  %1575 = vmatprep.subr.mxu0 0.0
  %1576 = vmatpush2.msra.mxu0 %v1493
  %1577 = vmatprep.subr.mxu0 0.0
  %1578 = vmatpush2.msra.mxu0 %v1492
  %1579 = vmatprep.mubr.f32.mxu0 %v1474
  %1580 = vmatmul.mubr.f32.gmra.mxu0 %v1472
  %v1581 = vpop.f32.mrf.mxu0
  %v1582 = vadd.f32 %v1513, %v1581
  %v1583 = vpop.f32.mrf.mxu0
  %1584 = vdwg.mxu0
  %vm1585 = vcmask 80896
  %1586 = vst.msk [vmem:[%s13] sm:$0xff] %vm1585, %v1582
  // Predicated region
  $region54: #{regnet_with_attention_forward.3} parent=0 // pred_check
    _
  $region55: #{regnet_with_attention_forward.3} parent=0 // pred_check_branch
    %1588 = sbr.rel (0) target = $region57
  $region56: #{regnet_with_attention_forward.3} parent=0 // pred_region
    _
  $region57: #{regnet_with_attention_forward.3} parent=0 // pred_fallthru
    _
  // Predicated region
  $region58: #{regnet_with_attention_forward.3} parent=0 // pred_check
    _
  $region59: #{regnet_with_attention_forward.3} parent=0 // pred_check_branch
    %1590 = sbr.rel (0) target = $region61
  $region60: #{regnet_with_attention_forward.3} parent=0 // pred_region
    _
  $region61: #{regnet_with_attention_forward.3} parent=0 // pred_fallthru
    _

</llo_original>
